<compile_context>
chip_gen: v5e
topology: v5e:2x2
jax: 0.10.0
libtpu: 0.0.40
codegen_flags: <defaults>
</compile_context>

<pallas_src>
import functools
import math

import jax
import jax.numpy as jnp
from jax.experimental import pallas as pl
from jax.experimental.pallas import tpu as pltpu


# ----------------------------- helpers ------------------------------------- #

def _round_up(x, m):
    return (x + m - 1) // m * m


def _pick_div_tile(d, target, mult=128):
    """Largest `mult`-multiple tile <= target that divides d, else full d."""
    target = max(mult, (target // mult) * mult)
    if d <= target or d % mult != 0:
        return d
    for t in range(target, 0, -mult):
        if d % t == 0:
            return t
    return d


def _pick_seq_tile(seq, target=128):
    """Largest 8-multiple tile <= target that divides seq, else full seq."""
    if seq % 8 != 0:
        return seq
    for t in range(min(target, seq), 0, -8):
        if seq % t == 0:
            return t
    return seq


def _pick_row_tile(n, target=256):
    """Row tile (multiple of 8) that keeps padding small (<= max(n//8, 8))."""
    n8 = _round_up(n, 8)
    if n8 <= target:
        return n8
    for t in (target, target // 2, target // 4, 32, 16, 8):
        if t >= 8 and _round_up(n, t) - n <= max(n // 8, 8):
            return t
    return 8


def _block_bytes(shape, dtype):
    """Bytes of a VMEM block, accounting for (8, 128) tile padding."""
    s = list(shape)
    if len(s) >= 2:
        s[-2] = _round_up(s[-2], 8)
        s[-1] = _round_up(s[-1], 128)
    elif len(s) == 1:
        s[-1] = _round_up(s[-1], 128)
    n = 1
    for d in s:
        n *= d
    return n * jnp.dtype(dtype).itemsize


def _vmem_limit(block_bytes, scratch_bytes):
    # Pipeline double-buffers each block; add headroom for Mosaic internals.
    # Clamp to [16 MiB, 64 MiB] (v7x has only 64 MiB physical VMEM).
    est = 2 * block_bytes + scratch_bytes + (8 << 20)
    return int(min(max(est, 16 << 20), 64 << 20))


# ------------- stacked/tiled linear: out[p] = x[p] @ W[p] + b[p] ----------- #

def _stacked_linear_kernel(x_ref, w_ref, b_ref, o_ref, acc_ref):
    kk = pl.program_id(3)

    @pl.when(kk == 0)
    def _():
        # Fold the bias into the accumulator init (one broadcast, init step only).
        acc_ref[...] = jnp.broadcast_to(
            b_ref[0].astype(jnp.float32), acc_ref.shape)

    acc_ref[...] += jnp.dot(x_ref[0], w_ref[0],
                            preferred_element_type=jnp.float32)

    @pl.when(kk == pl.num_programs(3) - 1)
    def _():
        o_ref[0] = acc_ref[...].astype(o_ref.dtype)


def _stacked_linear(x3, w3, b3, *, tm_target=256, tk_target=512, tn_target=512):
    """x3: (P, n, d_in); w3: (P, d_in, d_out) (pre-transposed); b3: (P, d_out)."""
    P, n, d_in = x3.shape
    d_out = w3.shape[2]

    tm = _pick_row_tile(n, tm_target)
    n_pad = _round_up(n, tm)
    if n_pad != n:
        x3 = jnp.pad(x3, ((0, 0), (0, n_pad - n), (0, 0)))

    tk = _pick_div_tile(d_in, tk_target)
    tn = _pick_div_tile(d_out, tn_target)
    b3 = b3.reshape(P, 1, d_out)
    itemsize = jnp.dtype(x3.dtype).itemsize

    cost = pl.CostEstimate(
        flops=2 * P * n_pad * d_in * d_out,
        transcendentals=0,
        bytes_accessed=P * (n_pad * d_in + d_in * d_out + n_pad * d_out) * itemsize,
    )
    block_bytes = (_block_bytes((tm, tk), x3.dtype)
                   + _block_bytes((tk, tn), w3.dtype)
                   + _block_bytes((1, tn), b3.dtype)
                   + _block_bytes((tm, tn), x3.dtype))
    scratch_bytes = _block_bytes((tm, tn), jnp.float32)

    out = pl.pallas_call(
        _stacked_linear_kernel,
        out_shape=jax.ShapeDtypeStruct((P, n_pad, d_out), x3.dtype),
        grid_spec=pltpu.PrefetchScalarGridSpec(
            num_scalar_prefetch=0,
            grid=(P, n_pad // tm, d_out // tn, d_in // tk),
            in_specs=[
                pl.BlockSpec((1, tm, tk), lambda p, i, j, k: (p, i, k)),   # x rows
                pl.BlockSpec((1, tk, tn), lambda p, i, j, k: (p, k, j)),   # W^T tile
                pl.BlockSpec((1, 1, tn), lambda p, i, j, k: (p, 0, j)),    # bias
            ],
            out_specs=pl.BlockSpec((1, tm, tn), lambda p, i, j, k: (p, i, j)),
            scratch_shapes=[pltpu.VMEM((tm, tn), jnp.float32)],
        ),
        compiler_params=pltpu.CompilerParams(
            dimension_semantics=("parallel", "parallel", "parallel", "arbitrary"),
            vmem_limit_bytes=_vmem_limit(block_bytes, scratch_bytes),
        ),
        cost_estimate=cost,
    )(x3, w3, b3)

    return out[:, :n] if n_pad != n else out


# ------ flash-style attention, all heads per step, lane-dense output ------- #

def _attn_kernel(q_ref, k_ref, v_ref, o_ref, m_sc, l_sc, acc_sc, *,
                 scale, n_head):
    kv = pl.program_id(2)

    @pl.when(kv == 0)
    def _():
        m_sc[...] = jnp.full_like(m_sc, -jnp.inf)
        l_sc[...] = jnp.zeros_like(l_sc)
        acc_sc[...] = jnp.zeros_like(acc_sc)

    q = q_ref[0] * scale                 # (n_head, tq, d_head); scale folded into Q
    k = k_ref[0]                         # (n_head, tkv, d_head)
    v = v_ref[0]                         # (n_head, tkv, d_head)

    s = jnp.einsum("hqd,hkd->hqk", q, k,
                   preferred_element_type=jnp.float32)          # (n_head, tq, tkv)

    m_prev = m_sc[...]
    m_new = jnp.maximum(m_prev, s.max(axis=-1, keepdims=True))
    alpha = jnp.exp(m_prev - m_new)
    p = jnp.exp(s - m_new)
    l_sc[...] = alpha * l_sc[...] + p.sum(axis=-1, keepdims=True)
    acc_sc[...] = alpha * acc_sc[...] + jnp.einsum(
        "hqk,hkd->hqd", p.astype(v.dtype), v,
        preferred_element_type=jnp.float32)
    m_sc[...] = m_new

    @pl.when(kv == pl.num_programs(2) - 1)
    def _():
        inv_l = pl.reciprocal(l_sc[...], approx=True)           # EUP slot
        out = acc_sc[...] * inv_l                               # (n_head, tq, d_head)
        # Lane-concatenate heads -> dense (tq, d_model) tile (matches torch concat()).
        o_ref[0] = jnp.concatenate(
            [out[h] for h in range(n_head)], axis=-1).astype(o_ref.dtype)


def _attention(qh, kh, vh, *, scale):
    """qh: (batch, n_head, lq, d_head); kh/vh: (batch, n_head, lk, d_head).

    Returns (batch, lq, n_head*d_head) with heads already concatenated."""
    batch, n_head, lq, d_head = qh.shape
    lk = kh.shape[2]
    d_model = n_head * d_head
    tq = _pick_seq_tile(lq)
    tkv = _pick_seq_tile(lk)
    itemsize = jnp.dtype(qh.dtype).itemsize

    cost = pl.CostEstimate(
        flops=4 * batch * n_head * lq * lk * d_head,
        transcendentals=batch * n_head * lq * lk,
        bytes_accessed=(batch * n_head * (lq + 2 * lk) * d_head
                        + batch * lq * d_model) * itemsize,
    )
    block_bytes = (_block_bytes((n_head, tq, d_head), qh.dtype)
                   + 2 * _block_bytes((n_head, tkv, d_head), kh.dtype)
                   + _block_bytes((tq, d_model), qh.dtype))
    scratch_bytes = (2 * _block_bytes((n_head, tq, 1), jnp.float32)
                     + _block_bytes((n_head, tq, d_head), jnp.float32))

    return pl.pallas_call(
        functools.partial(_attn_kernel, scale=scale, n_head=n_head),
        out_shape=jax.ShapeDtypeStruct((batch, lq, d_model), qh.dtype),
        grid_spec=pltpu.PrefetchScalarGridSpec(
            num_scalar_prefetch=0,
            grid=(batch, lq // tq, lk // tkv),
            in_specs=[
                pl.BlockSpec((1, n_head, tq, d_head),
                             lambda b, qi, ki: (b, 0, qi, 0)),
                pl.BlockSpec((1, n_head, tkv, d_head),
                             lambda b, qi, ki: (b, 0, ki, 0)),
                pl.BlockSpec((1, n_head, tkv, d_head),
                             lambda b, qi, ki: (b, 0, ki, 0)),
            ],
            out_specs=pl.BlockSpec((1, tq, d_model),
                                   lambda b, qi, ki: (b, qi, 0)),
            scratch_shapes=[
                pltpu.VMEM((n_head, tq, 1), jnp.float32),       # running max
                pltpu.VMEM((n_head, tq, 1), jnp.float32),       # running sum
                pltpu.VMEM((n_head, tq, d_head), jnp.float32),  # output accumulator
            ],
        ),
        compiler_params=pltpu.CompilerParams(
            dimension_semantics=("parallel", "parallel", "arbitrary"),
            vmem_limit_bytes=_vmem_limit(block_bytes, scratch_bytes),
        ),
        cost_estimate=cost,
    )(qh, kh, vh)


# ------------------------------ full module --------------------------------- #

@functools.partial(jax.jit, static_argnames=("n_head",))
def multi_head_attention(q, k, v, wq_t, bq, wk_t, bk, wv_t, bv, wc_t, bc,
                         *, n_head):
    """q: (batch, lq, d_model); k, v: (batch, lk, d_model).

    Weights are pre-transposed (d_in, d_out)."""
    batch, lq, d_model = q.shape
    lk = k.shape[1]
    assert d_model % n_head == 0
    d_head = d_model // n_head
    scale = 1.0 / math.sqrt(d_head)

    # --- fused Q/K/V projection: single pallas_call over a stacked leading axis.
    if q.shape == k.shape == v.shape:
        x_all = jnp.stack([q.reshape(-1, d_model),
                           k.reshape(-1, d_model),
                           v.reshape(-1, d_model)], axis=0)     # (3, b*l, d)
        w_all = jnp.stack([wq_t, wk_t, wv_t], axis=0)           # (3, d, d)
        b_all = jnp.stack([bq, bk, bv], axis=0)                 # (3, d)
        qkv = _stacked_linear(x_all, w_all, b_all)              # (3, b*l, d)
        q2, k2, v2 = qkv[0], qkv[1], qkv[2]
    else:  # cross-attention with differing lengths: per-tensor fallback
        q2 = _stacked_linear(q.reshape(1, -1, d_model), wq_t[None], bq[None])[0]
        k2 = _stacked_linear(k.reshape(1, -1, d_model), wk_t[None], bk[None])[0]
        v2 = _stacked_linear(v.reshape(1, -1, d_model), wv_t[None], bv[None])[0]

    def split_heads(x2d, length):  # (batch*len, d_model) -> (batch, heads, len, d_head)
        return (x2d.reshape(batch, length, n_head, d_head)
                    .transpose(0, 2, 1, 3))

    # Attention emits (batch, lq, d_model) with heads already lane-concatenated,
    # so the torch concat()/transpose is free here.
    ctx = _attention(split_heads(q2, lq), split_heads(k2, lk),
                     split_heads(v2, lk), scale=scale)

    out = _stacked_linear(ctx.reshape(1, batch * lq, d_model),
                          wc_t[None], bc[None])[0]
    return out.reshape(batch, lq, d_model)


def init_params(key, d_model, dtype=jnp.float32):
    """Mimic nn.Linear defaults (uniform +/- 1/sqrt(fan_in)); weights stored transposed."""
    lim = 1.0 / math.sqrt(d_model)
    ks = jax.random.split(key, 8)

    def lin(kw, kb):
        w_t = jax.random.uniform(kw, (d_model, d_model), dtype, -lim, lim)
        b = jax.random.uniform(kb, (d_model,), dtype, -lim, lim)
        return w_t, b

    wq_t, bq = lin(ks[0], ks[1])
    wk_t, bk = lin(ks[2], ks[3])
    wv_t, bv = lin(ks[4], ks[5])
    wc_t, bc = lin(ks[6], ks[7])
    return wq_t, bq, wk_t, bk, wv_t, bv, wc_t, bc


def _reference_mha(q, k, v, wq_t, bq, wk_t, bk, wv_t, bv, wc_t, bc, n_head):
    batch, lq, d_model = q.shape
    d_head = d_model // n_head
    hp = jax.lax.Precision.HIGHEST

    def lin(x, w_t, b):
        return jnp.einsum("bsd,de->bse", x, w_t, precision=hp) + b

    def split(t):
        b, l, _ = t.shape
        return t.reshape(b, l, n_head, d_head).transpose(0, 2, 1, 3)

    qh = split(lin(q, wq_t, bq))
    kh = split(lin(k, wk_t, bk))
    vh = split(lin(v, wv_t, bv))
    s = jnp.einsum("bhqd,bhkd->bhqk", qh, kh, precision=hp) / math.sqrt(d_head)
    p = jax.nn.softmax(s, axis=-1)
    o = jnp.einsum("bhqk,bhkd->bhqd", p, vh, precision=hp)
    o = o.transpose(0, 2, 1, 3).reshape(batch, lq, d_model)
    return lin(o, wc_t, bc)


if __name__ == "__main__":
    key = jax.random.PRNGKey(0)
    batch, seq, d_model, n_head = 2, 16, 128, 4   # lane-dense d_model (128-multiple)

    kq, kk, kv_, kp = jax.random.split(key, 4)
    q = jax.random.normal(kq, (batch, seq, d_model), jnp.float32)
    k = jax.random.normal(kk, (batch, seq, d_model), jnp.float32)
    v = jax.random.normal(kv_, (batch, seq, d_model), jnp.float32)
    params = init_params(kp, d_model)

    out = multi_head_attention(q, k, v, *params, n_head=n_head)
    out = jax.block_until_ready(out)

    ref = _reference_mha(q, k, v, *params, n_head)
    assert out.shape == (batch, seq, d_model)
    max_err = float(jnp.max(jnp.abs(out - ref)))
    assert max_err < 5e-3, f"max abs err {max_err}"

    print("KERNEL_OK")
</pallas_src>

<mosaic_0001>
module attributes {stable_mosaic.version = 11 : i64} {
  func.func @_attn_kernel(%arg0: i32, %arg1: i32, %arg2: i32, %arg3: memref<1x4x16x32xf32, #tpu.memory_space<vmem>>, %arg4: memref<1x4x16x32xf32, #tpu.memory_space<vmem>>, %arg5: memref<1x4x16x32xf32, #tpu.memory_space<vmem>>, %arg6: memref<1x16x128xf32, #tpu.memory_space<vmem>>, %arg7: memref<4x16x1xf32, #tpu.memory_space<vmem>>, %arg8: memref<4x16x1xf32, #tpu.memory_space<vmem>>, %arg9: memref<4x16x32xf32, #tpu.memory_space<vmem>>) attributes {dimension_semantics = [#tpu.dimension_semantics<parallel>, #tpu.dimension_semantics<parallel>, #tpu.dimension_semantics<arbitrary>], iteration_bounds = array<i64: 2, 1, 1>, scalar_prefetch = 0 : i64, scratch_operands = 3 : i64, tpu.core_type = #tpu.core_type<tc>, window_params = [{transform_indices = @transform_0, window_bounds = array<i64: 1, 4, 16, 32>}, {transform_indices = @transform_1, window_bounds = array<i64: 1, 4, 16, 32>}, {transform_indices = @transform_2, window_bounds = array<i64: 1, 4, 16, 32>}, {transform_indices = @transform_3, window_bounds = array<i64: 1, 16, 128>}]} {
    %c0_i32 = arith.constant 0 : i32
    %0 = arith.cmpi eq, %arg2, %c0_i32 : i32
    %1 = arith.extui %0 : i1 to i32
    %c0_i32_0 = arith.constant 0 : i32
    %2 = arith.cmpi ne, %1, %c0_i32_0 : i32
    scf.if %2 {
      %cst_36 = arith.constant 0xFF800000 : f32
      %37 = vector.broadcast %cst_36 : f32 to vector<4x16x1xf32>
      %c0_37 = arith.constant 0 : index
      %c0_38 = arith.constant 0 : index
      %c0_39 = arith.constant 0 : index
      %38 = vector.load %arg7[%c0_37, %c0_38, %c0_39] : memref<4x16x1xf32, #tpu.memory_space<vmem>>, vector<4x16x1xf32>
      tpu.vector_store %arg7[%c0_37, %c0_38, %c0_39], %37 {strides = array<i32>} : memref<4x16x1xf32, #tpu.memory_space<vmem>>, vector<4x16x1xf32>,
      %cst_40 = arith.constant 0.000000e+00 : f32
      %39 = vector.broadcast %cst_40 : f32 to vector<4x16x1xf32>
      %c0_41 = arith.constant 0 : index
      %c0_42 = arith.constant 0 : index
      %c0_43 = arith.constant 0 : index
      %40 = vector.load %arg8[%c0_41, %c0_42, %c0_43] : memref<4x16x1xf32, #tpu.memory_space<vmem>>, vector<4x16x1xf32>
      tpu.vector_store %arg8[%c0_41, %c0_42, %c0_43], %39 {strides = array<i32>} : memref<4x16x1xf32, #tpu.memory_space<vmem>>, vector<4x16x1xf32>,
      %cst_44 = arith.constant 0.000000e+00 : f32
      %41 = vector.broadcast %cst_44 : f32 to vector<4x16x32xf32>
      %c0_45 = arith.constant 0 : index
      %c0_46 = arith.constant 0 : index
      %c0_47 = arith.constant 0 : index
      %42 = vector.load %arg9[%c0_45, %c0_46, %c0_47] : memref<4x16x32xf32, #tpu.memory_space<vmem>>, vector<4x16x32xf32>
      tpu.vector_store %arg9[%c0_45, %c0_46, %c0_47], %41 {strides = array<i32>} : memref<4x16x32xf32, #tpu.memory_space<vmem>>, vector<4x16x32xf32>,
    } else {
    }
    %c0 = arith.constant 0 : index
    %c0_1 = arith.constant 0 : index
    %c0_2 = arith.constant 0 : index
    %c0_3 = arith.constant 0 : index
    %3 = vector.load %arg3[%c0, %c0_1, %c0_2, %c0_3] : memref<1x4x16x32xf32, #tpu.memory_space<vmem>>, vector<1x4x16x32xf32>
    %4 = vector.shape_cast %3 : vector<1x4x16x32xf32> to vector<4x16x32xf32>
    %cst = arith.constant 0.176776692 : f32
    %5 = vector.broadcast %cst : f32 to vector<4x16x32xf32>
    %6 = arith.mulf %4, %5 : vector<4x16x32xf32>
    %c0_4 = arith.constant 0 : index
    %c0_5 = arith.constant 0 : index
    %c0_6 = arith.constant 0 : index
    %c0_7 = arith.constant 0 : index
    %7 = vector.load %arg4[%c0_4, %c0_5, %c0_6, %c0_7] : memref<1x4x16x32xf32, #tpu.memory_space<vmem>>, vector<1x4x16x32xf32>
    %8 = vector.shape_cast %7 : vector<1x4x16x32xf32> to vector<4x16x32xf32>
    %c0_8 = arith.constant 0 : index
    %c0_9 = arith.constant 0 : index
    %c0_10 = arith.constant 0 : index
    %c0_11 = arith.constant 0 : index
    %9 = vector.load %arg5[%c0_8, %c0_9, %c0_10, %c0_11] : memref<1x4x16x32xf32, #tpu.memory_space<vmem>>, vector<1x4x16x32xf32>
    %10 = vector.shape_cast %9 : vector<1x4x16x32xf32> to vector<4x16x32xf32>
    "tpu.trace_start"() <{level = 10 : i32, message = "hqd,hkd->hqk"}> : () -> ()
    %cst_12 = arith.constant dense<0.000000e+00> : vector<4x16x16xf32>
    %11 = tpu.matmul %6, %8, %cst_12 {dimension_numbers = #tpu.dot_dimension_numbers<[2], [2], [1], [1], [0, 0, 0, 1, 1, 1], [0], [0]>} : vector<4x16x32xf32>, vector<4x16x32xf32>, vector<4x16x16xf32> -> vector<4x16x16xf32>
    "tpu.trace_stop"() : () -> ()
    %c0_13 = arith.constant 0 : index
    %c0_14 = arith.constant 0 : index
    %c0_15 = arith.constant 0 : index
    %12 = vector.load %arg7[%c0_13, %c0_14, %c0_15] : memref<4x16x1xf32, #tpu.memory_space<vmem>>, vector<4x16x1xf32>
    %cst_16 = arith.constant dense<0xFF800000> : vector<4x16xf32>
    %13 = vector.multi_reduction <maximumf>, %11, %cst_16 [2] : vector<4x16x16xf32> to vector<4x16xf32>
    %14 = vector.shape_cast %13 : vector<4x16xf32> to vector<4x16x1xf32>
    %15 = arith.maximumf %12, %14 : vector<4x16x1xf32>
    %16 = arith.subf %12, %15 : vector<4x16x1xf32>
    %17 = math.exp %16 : vector<4x16x1xf32>
    %18 = vector.broadcast %15 : vector<4x16x1xf32> to vector<4x16x16xf32>
    %19 = arith.subf %11, %18 : vector<4x16x16xf32>
    %20 = math.exp %19 : vector<4x16x16xf32>
    %c0_17 = arith.constant 0 : index
    %c0_18 = arith.constant 0 : index
    %c0_19 = arith.constant 0 : index
    %21 = vector.load %arg8[%c0_17, %c0_18, %c0_19] : memref<4x16x1xf32, #tpu.memory_space<vmem>>, vector<4x16x1xf32>
    %22 = arith.mulf %17, %21 : vector<4x16x1xf32>
    %cst_20 = arith.constant dense<0.000000e+00> : vector<4x16xf32>
    %23 = vector.multi_reduction <add>, %20, %cst_20 [2] : vector<4x16x16xf32> to vector<4x16xf32>
    %24 = vector.shape_cast %23 : vector<4x16xf32> to vector<4x16x1xf32>
    %25 = arith.addf %22, %24 : vector<4x16x1xf32>
    %c0_21 = arith.constant 0 : index
    %c0_22 = arith.constant 0 : index
    %c0_23 = arith.constant 0 : index
    %26 = vector.load %arg8[%c0_21, %c0_22, %c0_23] : memref<4x16x1xf32, #tpu.memory_space<vmem>>, vector<4x16x1xf32>
    tpu.vector_store %arg8[%c0_21, %c0_22, %c0_23], %25 {strides = array<i32>} : memref<4x16x1xf32, #tpu.memory_space<vmem>>, vector<4x16x1xf32>,
    %c0_24 = arith.constant 0 : index
    %c0_25 = arith.constant 0 : index
    %c0_26 = arith.constant 0 : index
    %27 = vector.load %arg9[%c0_24, %c0_25, %c0_26] : memref<4x16x32xf32, #tpu.memory_space<vmem>>, vector<4x16x32xf32>
    %28 = vector.broadcast %17 : vector<4x16x1xf32> to vector<4x16x32xf32>
    %29 = arith.mulf %28, %27 : vector<4x16x32xf32>
    "tpu.trace_start"() <{level = 10 : i32, message = "hqk,hkd->hqd"}> : () -> ()
    %cst_27 = arith.constant dense<0.000000e+00> : vector<4x16x32xf32>
    %30 = tpu.matmul %20, %10, %cst_27 {dimension_numbers = #tpu.dot_dimension_numbers<[2], [1], [1], [2], [0, 0, 0, 1, 1, 2], [0], [0]>} : vector<4x16x16xf32>, vector<4x16x32xf32>, vector<4x16x32xf32> -> vector<4x16x32xf32>
    "tpu.trace_stop"() : () -> ()
    %31 = arith.addf %29, %30 : vector<4x16x32xf32>
    %c0_28 = arith.constant 0 : index
    %c0_29 = arith.constant 0 : index
    %c0_30 = arith.constant 0 : index
    %32 = vector.load %arg9[%c0_28, %c0_29, %c0_30] : memref<4x16x32xf32, #tpu.memory_space<vmem>>, vector<4x16x32xf32>
    tpu.vector_store %arg9[%c0_28, %c0_29, %c0_30], %31 {strides = array<i32>} : memref<4x16x32xf32, #tpu.memory_space<vmem>>, vector<4x16x32xf32>,
    %c0_31 = arith.constant 0 : index
    %c0_32 = arith.constant 0 : index
    %c0_33 = arith.constant 0 : index
    %33 = vector.load %arg7[%c0_31, %c0_32, %c0_33] : memref<4x16x1xf32, #tpu.memory_space<vmem>>, vector<4x16x1xf32>
    tpu.vector_store %arg7[%c0_31, %c0_32, %c0_33], %15 {strides = array<i32>} : memref<4x16x1xf32, #tpu.memory_space<vmem>>, vector<4x16x1xf32>,
    %c0_i32_34 = arith.constant 0 : i32
    %34 = arith.cmpi eq, %arg2, %c0_i32_34 : i32
    %35 = arith.extui %34 : i1 to i32
    %c0_i32_35 = arith.constant 0 : i32
    %36 = arith.cmpi ne, %35, %c0_i32_35 : i32
    scf.if %36 {
      %c0_36 = arith.constant 0 : index
      %c0_37 = arith.constant 0 : index
      %c0_38 = arith.constant 0 : index
      %37 = vector.load %arg8[%c0_36, %c0_37, %c0_38] : memref<4x16x1xf32, #tpu.memory_space<vmem>>, vector<4x16x1xf32>
      %38 = tpu.reciprocal %37 {approx = true} : vector<4x16x1xf32> -> vector<4x16x1xf32>
      %c0_39 = arith.constant 0 : index
      %c0_40 = arith.constant 0 : index
      %c0_41 = arith.constant 0 : index
      %39 = vector.load %arg9[%c0_39, %c0_40, %c0_41] : memref<4x16x32xf32, #tpu.memory_space<vmem>>, vector<4x16x32xf32>
      %40 = vector.broadcast %38 : vector<4x16x1xf32> to vector<4x16x32xf32>
      %41 = arith.mulf %39, %40 : vector<4x16x32xf32>
      %42 = vector.extract_strided_slice %41 {offsets = [0, 0, 0], sizes = [1, 16, 32], strides = [1, 1, 1]} : vector<4x16x32xf32> to vector<1x16x32xf32>
      %43 = vector.shape_cast %42 : vector<1x16x32xf32> to vector<16x32xf32>
      %44 = vector.extract_strided_slice %41 {offsets = [1, 0, 0], sizes = [1, 16, 32], strides = [1, 1, 1]} : vector<4x16x32xf32> to vector<1x16x32xf32>
      %45 = vector.shape_cast %44 : vector<1x16x32xf32> to vector<16x32xf32>
      %46 = vector.extract_strided_slice %41 {offsets = [2, 0, 0], sizes = [1, 16, 32], strides = [1, 1, 1]} : vector<4x16x32xf32> to vector<1x16x32xf32>
      %47 = vector.shape_cast %46 : vector<1x16x32xf32> to vector<16x32xf32>
      %48 = vector.extract_strided_slice %41 {offsets = [3, 0, 0], sizes = [1, 16, 32], strides = [1, 1, 1]} : vector<4x16x32xf32> to vector<1x16x32xf32>
      %49 = vector.shape_cast %48 : vector<1x16x32xf32> to vector<16x32xf32>
      %50 = tpu.concatenate %43, %45, %47, %49 in 1 : vector<16x32xf32>, vector<16x32xf32>, vector<16x32xf32>, vector<16x32xf32> -> vector<16x128xf32>
      %c0_42 = arith.constant 0 : index
      %c0_43 = arith.constant 0 : index
      %c0_44 = arith.constant 0 : index
      %51 = vector.load %arg6[%c0_42, %c0_43, %c0_44] : memref<1x16x128xf32, #tpu.memory_space<vmem>>, vector<1x16x128xf32>
      %52 = vector.shape_cast %51 : vector<1x16x128xf32> to vector<16x128xf32>
      %53 = vector.shape_cast %50 : vector<16x128xf32> to vector<1x16x128xf32>
      tpu.vector_store %arg6[%c0_42, %c0_43, %c0_44], %53 {strides = array<i32>} : memref<1x16x128xf32, #tpu.memory_space<vmem>>, vector<1x16x128xf32>,
    } else {
    }
    return
  }
  func.func @transform_0(%arg0: i32, %arg1: i32, %arg2: i32) -> (i32, i32, i32, i32) {
    %c0_i32 = arith.constant 0 : i32
    %c0_i32_0 = arith.constant 0 : i32
    %c0_i32_1 = arith.constant 0 : i32
    return %arg0, %c0_i32, %arg1, %c0_i32_0 : i32, i32, i32, i32
  }
  func.func @transform_1(%arg0: i32, %arg1: i32, %arg2: i32) -> (i32, i32, i32, i32) {
    %c0_i32 = arith.constant 0 : i32
    %c0_i32_0 = arith.constant 0 : i32
    %c0_i32_1 = arith.constant 0 : i32
    return %arg0, %c0_i32, %arg2, %c0_i32_0 : i32, i32, i32, i32
  }
  func.func @transform_2(%arg0: i32, %arg1: i32, %arg2: i32) -> (i32, i32, i32, i32) {
    %c0_i32 = arith.constant 0 : i32
    %c0_i32_0 = arith.constant 0 : i32
    %c0_i32_1 = arith.constant 0 : i32
    return %arg0, %c0_i32, %arg2, %c0_i32_0 : i32, i32, i32, i32
  }
  func.func @transform_3(%arg0: i32, %arg1: i32, %arg2: i32) -> (i32, i32, i32) {
    %c0_i32 = arith.constant 0 : i32
    %c0_i32_0 = arith.constant 0 : i32
    return %arg0, %arg1, %c0_i32 : i32, i32, i32
  }
}

module attributes {stable_mosaic.version = 11 : i64} {
  func.func @_stacked_linear_kernel(%arg0: i32, %arg1: i32, %arg2: i32, %arg3: i32, %arg4: memref<1x32x128xf32, #tpu.memory_space<vmem>>, %arg5: memref<1x128x128xf32, #tpu.memory_space<vmem>>, %arg6: memref<1x1x128xf32, #tpu.memory_space<vmem>>, %arg7: memref<1x32x128xf32, #tpu.memory_space<vmem>>, %arg8: memref<32x128xf32, #tpu.memory_space<vmem>>) attributes {dimension_semantics = [#tpu.dimension_semantics<parallel>, #tpu.dimension_semantics<parallel>, #tpu.dimension_semantics<parallel>, #tpu.dimension_semantics<arbitrary>], iteration_bounds = array<i64: 1, 1, 1, 1>, scalar_prefetch = 0 : i64, scratch_operands = 1 : i64, tpu.core_type = #tpu.core_type<tc>, window_params = [{transform_indices = @transform_0, window_bounds = array<i64: 1, 32, 128>}, {transform_indices = @transform_1, window_bounds = array<i64: 1, 128, 128>}, {transform_indices = @transform_2, window_bounds = array<i64: 1, 1, 128>}, {transform_indices = @transform_3, window_bounds = array<i64: 1, 32, 128>}]} {
    %c0_i32 = arith.constant 0 : i32
    %0 = arith.cmpi eq, %arg3, %c0_i32 : i32
    %1 = arith.extui %0 : i1 to i32
    %c0_i32_0 = arith.constant 0 : i32
    %2 = arith.cmpi ne, %1, %c0_i32_0 : i32
    scf.if %2 {
      %c0_12 = arith.constant 0 : index
      %c0_13 = arith.constant 0 : index
      %c0_14 = arith.constant 0 : index
      %14 = vector.load %arg6[%c0_12, %c0_13, %c0_14] : memref<1x1x128xf32, #tpu.memory_space<vmem>>, vector<1x1x128xf32>
      %15 = vector.shape_cast %14 : vector<1x1x128xf32> to vector<1x128xf32>
      %16 = vector.shape_cast %15 : vector<1x128xf32> to vector<1x128xf32>
      %17 = vector.broadcast %16 : vector<1x128xf32> to vector<32x128xf32>
      %c0_15 = arith.constant 0 : index
      %c0_16 = arith.constant 0 : index
      %18 = vector.load %arg8[%c0_15, %c0_16] : memref<32x128xf32, #tpu.memory_space<vmem>>, vector<32x128xf32>
      tpu.vector_store %arg8[%c0_15, %c0_16], %17 {strides = array<i32>} : memref<32x128xf32, #tpu.memory_space<vmem>>, vector<32x128xf32>,
    } else {
    }
    %c0 = arith.constant 0 : index
    %c0_1 = arith.constant 0 : index
    %3 = vector.load %arg8[%c0, %c0_1] : memref<32x128xf32, #tpu.memory_space<vmem>>, vector<32x128xf32>
    %c0_2 = arith.constant 0 : index
    %c0_3 = arith.constant 0 : index
    %c0_4 = arith.constant 0 : index
    %4 = vector.load %arg4[%c0_2, %c0_3, %c0_4] : memref<1x32x128xf32, #tpu.memory_space<vmem>>, vector<1x32x128xf32>
    %5 = vector.shape_cast %4 : vector<1x32x128xf32> to vector<32x128xf32>
    %c0_5 = arith.constant 0 : index
    %c0_6 = arith.constant 0 : index
    %c0_7 = arith.constant 0 : index
    %6 = vector.load %arg5[%c0_5, %c0_6, %c0_7] : memref<1x128x128xf32, #tpu.memory_space<vmem>>, vector<1x128x128xf32>
    %7 = vector.shape_cast %6 : vector<1x128x128xf32> to vector<128x128xf32>
    %cst = arith.constant dense<0.000000e+00> : vector<32x128xf32>
    %8 = tpu.matmul %5, %7, %cst {dimension_numbers = #tpu.dot_dimension_numbers<[1], [0], [0], [1], [0, 0, 1, 1], [], []>} : vector<32x128xf32>, vector<128x128xf32>, vector<32x128xf32> -> vector<32x128xf32>
    %9 = arith.addf %3, %8 : vector<32x128xf32>
    %c0_8 = arith.constant 0 : index
    %c0_9 = arith.constant 0 : index
    %10 = vector.load %arg8[%c0_8, %c0_9] : memref<32x128xf32, #tpu.memory_space<vmem>>, vector<32x128xf32>
    tpu.vector_store %arg8[%c0_8, %c0_9], %9 {strides = array<i32>} : memref<32x128xf32, #tpu.memory_space<vmem>>, vector<32x128xf32>,
    %c0_i32_10 = arith.constant 0 : i32
    %11 = arith.cmpi eq, %arg3, %c0_i32_10 : i32
    %12 = arith.extui %11 : i1 to i32
    %c0_i32_11 = arith.constant 0 : i32
    %13 = arith.cmpi ne, %12, %c0_i32_11 : i32
    scf.if %13 {
      %c0_12 = arith.constant 0 : index
      %c0_13 = arith.constant 0 : index
      %14 = vector.load %arg8[%c0_12, %c0_13] : memref<32x128xf32, #tpu.memory_space<vmem>>, vector<32x128xf32>
      %c0_14 = arith.constant 0 : index
      %c0_15 = arith.constant 0 : index
      %c0_16 = arith.constant 0 : index
      %15 = vector.load %arg7[%c0_14, %c0_15, %c0_16] : memref<1x32x128xf32, #tpu.memory_space<vmem>>, vector<1x32x128xf32>
      %16 = vector.shape_cast %15 : vector<1x32x128xf32> to vector<32x128xf32>
      %17 = vector.shape_cast %14 : vector<32x128xf32> to vector<1x32x128xf32>
      tpu.vector_store %arg7[%c0_14, %c0_15, %c0_16], %17 {strides = array<i32>} : memref<1x32x128xf32, #tpu.memory_space<vmem>>, vector<1x32x128xf32>,
    } else {
    }
    return
  }
  func.func @transform_0(%arg0: i32, %arg1: i32, %arg2: i32, %arg3: i32) -> (i32, i32, i32) {
    %c0_i32 = arith.constant 0 : i32
    return %arg0, %arg1, %arg3 : i32, i32, i32
  }
  func.func @transform_1(%arg0: i32, %arg1: i32, %arg2: i32, %arg3: i32) -> (i32, i32, i32) {
    %c0_i32 = arith.constant 0 : i32
    return %arg0, %arg3, %arg2 : i32, i32, i32
  }
  func.func @transform_2(%arg0: i32, %arg1: i32, %arg2: i32, %arg3: i32) -> (i32, i32, i32) {
    %c0_i32 = arith.constant 0 : i32
    %c0_i32_0 = arith.constant 0 : i32
    return %arg0, %c0_i32, %arg2 : i32, i32, i32
  }
  func.func @transform_3(%arg0: i32, %arg1: i32, %arg2: i32, %arg3: i32) -> (i32, i32, i32) {
    %c0_i32 = arith.constant 0 : i32
    return %arg0, %arg1, %arg2 : i32, i32, i32
  }
}

module attributes {stable_mosaic.version = 11 : i64} {
  func.func @_stacked_linear_kernel(%arg0: i32, %arg1: i32, %arg2: i32, %arg3: i32, %arg4: memref<1x32x128xf32, #tpu.memory_space<vmem>>, %arg5: memref<1x128x128xf32, #tpu.memory_space<vmem>>, %arg6: memref<1x1x128xf32, #tpu.memory_space<vmem>>, %arg7: memref<1x32x128xf32, #tpu.memory_space<vmem>>, %arg8: memref<32x128xf32, #tpu.memory_space<vmem>>) attributes {dimension_semantics = [#tpu.dimension_semantics<parallel>, #tpu.dimension_semantics<parallel>, #tpu.dimension_semantics<parallel>, #tpu.dimension_semantics<arbitrary>], iteration_bounds = array<i64: 3, 1, 1, 1>, scalar_prefetch = 0 : i64, scratch_operands = 1 : i64, tpu.core_type = #tpu.core_type<tc>, window_params = [{transform_indices = @transform_0, window_bounds = array<i64: 1, 32, 128>}, {transform_indices = @transform_1, window_bounds = array<i64: 1, 128, 128>}, {transform_indices = @transform_2, window_bounds = array<i64: 1, 1, 128>}, {transform_indices = @transform_3, window_bounds = array<i64: 1, 32, 128>}]} {
    %c0_i32 = arith.constant 0 : i32
    %0 = arith.cmpi eq, %arg3, %c0_i32 : i32
    %1 = arith.extui %0 : i1 to i32
    %c0_i32_0 = arith.constant 0 : i32
    %2 = arith.cmpi ne, %1, %c0_i32_0 : i32
    scf.if %2 {
      %c0_12 = arith.constant 0 : index
      %c0_13 = arith.constant 0 : index
      %c0_14 = arith.constant 0 : index
      %14 = vector.load %arg6[%c0_12, %c0_13, %c0_14] : memref<1x1x128xf32, #tpu.memory_space<vmem>>, vector<1x1x128xf32>
      %15 = vector.shape_cast %14 : vector<1x1x128xf32> to vector<1x128xf32>
      %16 = vector.shape_cast %15 : vector<1x128xf32> to vector<1x128xf32>
      %17 = vector.broadcast %16 : vector<1x128xf32> to vector<32x128xf32>
      %c0_15 = arith.constant 0 : index
      %c0_16 = arith.constant 0 : index
      %18 = vector.load %arg8[%c0_15, %c0_16] : memref<32x128xf32, #tpu.memory_space<vmem>>, vector<32x128xf32>
      tpu.vector_store %arg8[%c0_15, %c0_16], %17 {strides = array<i32>} : memref<32x128xf32, #tpu.memory_space<vmem>>, vector<32x128xf32>,
    } else {
    }
    %c0 = arith.constant 0 : index
    %c0_1 = arith.constant 0 : index
    %3 = vector.load %arg8[%c0, %c0_1] : memref<32x128xf32, #tpu.memory_space<vmem>>, vector<32x128xf32>
    %c0_2 = arith.constant 0 : index
    %c0_3 = arith.constant 0 : index
    %c0_4 = arith.constant 0 : index
    %4 = vector.load %arg4[%c0_2, %c0_3, %c0_4] : memref<1x32x128xf32, #tpu.memory_space<vmem>>, vector<1x32x128xf32>
    %5 = vector.shape_cast %4 : vector<1x32x128xf32> to vector<32x128xf32>
    %c0_5 = arith.constant 0 : index
    %c0_6 = arith.constant 0 : index
    %c0_7 = arith.constant 0 : index
    %6 = vector.load %arg5[%c0_5, %c0_6, %c0_7] : memref<1x128x128xf32, #tpu.memory_space<vmem>>, vector<1x128x128xf32>
    %7 = vector.shape_cast %6 : vector<1x128x128xf32> to vector<128x128xf32>
    %cst = arith.constant dense<0.000000e+00> : vector<32x128xf32>
    %8 = tpu.matmul %5, %7, %cst {dimension_numbers = #tpu.dot_dimension_numbers<[1], [0], [0], [1], [0, 0, 1, 1], [], []>} : vector<32x128xf32>, vector<128x128xf32>, vector<32x128xf32> -> vector<32x128xf32>
    %9 = arith.addf %3, %8 : vector<32x128xf32>
    %c0_8 = arith.constant 0 : index
    %c0_9 = arith.constant 0 : index
    %10 = vector.load %arg8[%c0_8, %c0_9] : memref<32x128xf32, #tpu.memory_space<vmem>>, vector<32x128xf32>
    tpu.vector_store %arg8[%c0_8, %c0_9], %9 {strides = array<i32>} : memref<32x128xf32, #tpu.memory_space<vmem>>, vector<32x128xf32>,
    %c0_i32_10 = arith.constant 0 : i32
    %11 = arith.cmpi eq, %arg3, %c0_i32_10 : i32
    %12 = arith.extui %11 : i1 to i32
    %c0_i32_11 = arith.constant 0 : i32
    %13 = arith.cmpi ne, %12, %c0_i32_11 : i32
    scf.if %13 {
      %c0_12 = arith.constant 0 : index
      %c0_13 = arith.constant 0 : index
      %14 = vector.load %arg8[%c0_12, %c0_13] : memref<32x128xf32, #tpu.memory_space<vmem>>, vector<32x128xf32>
      %c0_14 = arith.constant 0 : index
      %c0_15 = arith.constant 0 : index
      %c0_16 = arith.constant 0 : index
      %15 = vector.load %arg7[%c0_14, %c0_15, %c0_16] : memref<1x32x128xf32, #tpu.memory_space<vmem>>, vector<1x32x128xf32>
      %16 = vector.shape_cast %15 : vector<1x32x128xf32> to vector<32x128xf32>
      %17 = vector.shape_cast %14 : vector<32x128xf32> to vector<1x32x128xf32>
      tpu.vector_store %arg7[%c0_14, %c0_15, %c0_16], %17 {strides = array<i32>} : memref<1x32x128xf32, #tpu.memory_space<vmem>>, vector<1x32x128xf32>,
    } else {
    }
    return
  }
  func.func @transform_0(%arg0: i32, %arg1: i32, %arg2: i32, %arg3: i32) -> (i32, i32, i32) {
    %c0_i32 = arith.constant 0 : i32
    return %arg0, %arg1, %arg3 : i32, i32, i32
  }
  func.func @transform_1(%arg0: i32, %arg1: i32, %arg2: i32, %arg3: i32) -> (i32, i32, i32) {
    %c0_i32 = arith.constant 0 : i32
    return %arg0, %arg3, %arg2 : i32, i32, i32
  }
  func.func @transform_2(%arg0: i32, %arg1: i32, %arg2: i32, %arg3: i32) -> (i32, i32, i32) {
    %c0_i32 = arith.constant 0 : i32
    %c0_i32_0 = arith.constant 0 : i32
    return %arg0, %c0_i32, %arg2 : i32, i32, i32
  }
  func.func @transform_3(%arg0: i32, %arg1: i32, %arg2: i32, %arg3: i32) -> (i32, i32, i32) {
    %c0_i32 = arith.constant 0 : i32
    return %arg0, %arg1, %arg2 : i32, i32, i32
  }
}

</mosaic_0001>

<llo_original>
// kernel: squeeze.6
$region0: #{squeeze.6}
  %s0 = inlined_call_operand.vmem [shape: f32[1,32,128], index: 0, kind: input, shape index: {}]
  %s1 = inlined_call_operand.vmem [shape: f32[2,16,4,32], index: 1, kind: output, shape index: {}]
  $region1: #{squeeze.6} parent=0
    #allocation0 [shape = 'u8[131072]{0}', space=vmem, size = 0x20000, scoped, tag = 'scoped mem for output reshape']
    %v2 = vld [vmem:[%s0] sm:$0xff]
    %vm3 = vcmask 261120
    %4 = vst.msk [vmem:[#allocation0] ss:$8 sm:$0xf] %vm3, %v2
    %5 = vst.msk [vmem:[#allocation0] ss:$8 sm:$0xf0] %vm3, %v2
    %s6 = scalar_lea.vmem %s0, 8
    %v7 = vld [vmem:[%s6] sm:$0xff]
    %vm8 = vcmask 261120
    %s9 = scalar_lea.vmem [#allocation0], 64
    %10 = vst.msk [vmem:[%s9] ss:$8 sm:$0xf] %vm8, %v7
    %s11 = scalar_lea.vmem [#allocation0], 64
    %12 = vst.msk [vmem:[%s11] ss:$8 sm:$0xf0] %vm8, %v7
    %s13 = scalar_lea.vmem %s0, 16
    %v14 = vld [vmem:[%s13] sm:$0xff]
    %vm15 = vcmask 261120
    %s16 = scalar_lea.vmem [#allocation0], 128
    %17 = vst.msk [vmem:[%s16] ss:$8 sm:$0xf] %vm15, %v14
    %s18 = scalar_lea.vmem [#allocation0], 128
    %19 = vst.msk [vmem:[%s18] ss:$8 sm:$0xf0] %vm15, %v14
    %s20 = scalar_lea.vmem %s0, 24
    %v21 = vld [vmem:[%s20] sm:$0xff]
    %vm22 = vcmask 261120
    %s23 = scalar_lea.vmem [#allocation0], 192
    %24 = vst.msk [vmem:[%s23] ss:$8 sm:$0xf] %vm22, %v21
    %s25 = scalar_lea.vmem [#allocation0], 192
    %26 = vst.msk [vmem:[%s25] ss:$8 sm:$0xf0] %vm22, %v21
    %v27 = vld [vmem:[%s0] sm:$0xff]
    %28 = vrot.lane.b32.xlu0 %v27, 96
    %v29 = vpop.permute.xlu0 %28
    %vm30 = vcmask 261120
    %s31 = scalar_lea.vmem [#allocation0], 1
    %32 = vst.msk [vmem:[%s31] ss:$8 sm:$0xf] %vm30, %v29
    %s33 = scalar_lea.vmem [#allocation0], 1
    %34 = vst.msk [vmem:[%s33] ss:$8 sm:$0xf0] %vm30, %v29
    %s35 = scalar_lea.vmem %s0, 8
    %v36 = vld [vmem:[%s35] sm:$0xff]
    %37 = vrot.lane.b32.xlu0 %v36, 96
    %v38 = vpop.permute.xlu0 %37
    %vm39 = vcmask 261120
    %s40 = scalar_lea.vmem [#allocation0], 65
    %41 = vst.msk [vmem:[%s40] ss:$8 sm:$0xf] %vm39, %v38
    %s42 = scalar_lea.vmem [#allocation0], 65
    %43 = vst.msk [vmem:[%s42] ss:$8 sm:$0xf0] %vm39, %v38
    %s44 = scalar_lea.vmem %s0, 16
    %v45 = vld [vmem:[%s44] sm:$0xff]
    %46 = vrot.lane.b32.xlu0 %v45, 96
    %v47 = vpop.permute.xlu0 %46
    %vm48 = vcmask 261120
    %s49 = scalar_lea.vmem [#allocation0], 129
    %50 = vst.msk [vmem:[%s49] ss:$8 sm:$0xf] %vm48, %v47
    %s51 = scalar_lea.vmem [#allocation0], 129
    %52 = vst.msk [vmem:[%s51] ss:$8 sm:$0xf0] %vm48, %v47
    %s53 = scalar_lea.vmem %s0, 24
    %v54 = vld [vmem:[%s53] sm:$0xff]
    %55 = vrot.lane.b32.xlu0 %v54, 96
    %v56 = vpop.permute.xlu0 %55
    %vm57 = vcmask 261120
    %s58 = scalar_lea.vmem [#allocation0], 193
    %59 = vst.msk [vmem:[%s58] ss:$8 sm:$0xf] %vm57, %v56
    %s60 = scalar_lea.vmem [#allocation0], 193
    %61 = vst.msk [vmem:[%s60] ss:$8 sm:$0xf0] %vm57, %v56
    %v62 = vld [vmem:[%s0] sm:$0xff]
    %63 = vrot.lane.b32.xlu0 %v62, 64
    %v64 = vpop.permute.xlu0 %63
    %vm65 = vcmask 261120
    %s66 = scalar_lea.vmem [#allocation0], 2
    %67 = vst.msk [vmem:[%s66] ss:$8 sm:$0xf] %vm65, %v64
    %s68 = scalar_lea.vmem [#allocation0], 2
    %69 = vst.msk [vmem:[%s68] ss:$8 sm:$0xf0] %vm65, %v64
    %s70 = scalar_lea.vmem %s0, 8
    %v71 = vld [vmem:[%s70] sm:$0xff]
    %72 = vrot.lane.b32.xlu0 %v71, 64
    %v73 = vpop.permute.xlu0 %72
    %vm74 = vcmask 261120
    %s75 = scalar_lea.vmem [#allocation0], 66
    %76 = vst.msk [vmem:[%s75] ss:$8 sm:$0xf] %vm74, %v73
    %s77 = scalar_lea.vmem [#allocation0], 66
    %78 = vst.msk [vmem:[%s77] ss:$8 sm:$0xf0] %vm74, %v73
    %s79 = scalar_lea.vmem %s0, 16
    %v80 = vld [vmem:[%s79] sm:$0xff]
    %81 = vrot.lane.b32.xlu0 %v80, 64
    %v82 = vpop.permute.xlu0 %81
    %vm83 = vcmask 261120
    %s84 = scalar_lea.vmem [#allocation0], 130
    %85 = vst.msk [vmem:[%s84] ss:$8 sm:$0xf] %vm83, %v82
    %s86 = scalar_lea.vmem [#allocation0], 130
    %87 = vst.msk [vmem:[%s86] ss:$8 sm:$0xf0] %vm83, %v82
    %s88 = scalar_lea.vmem %s0, 24
    %v89 = vld [vmem:[%s88] sm:$0xff]
    %90 = vrot.lane.b32.xlu0 %v89, 64
    %v91 = vpop.permute.xlu0 %90
    %vm92 = vcmask 261120
    %s93 = scalar_lea.vmem [#allocation0], 194
    %94 = vst.msk [vmem:[%s93] ss:$8 sm:$0xf] %vm92, %v91
    %s95 = scalar_lea.vmem [#allocation0], 194
    %96 = vst.msk [vmem:[%s95] ss:$8 sm:$0xf0] %vm92, %v91
    %v97 = vld [vmem:[%s0] sm:$0xff]
    %98 = vrot.lane.b32.xlu0 %v97, 32
    %v99 = vpop.permute.xlu0 %98
    %vm100 = vcmask 261120
    %s101 = scalar_lea.vmem [#allocation0], 3
    %102 = vst.msk [vmem:[%s101] ss:$8 sm:$0xf] %vm100, %v99
    %s103 = scalar_lea.vmem [#allocation0], 3
    %104 = vst.msk [vmem:[%s103] ss:$8 sm:$0xf0] %vm100, %v99
    %s105 = scalar_lea.vmem %s0, 8
    %v106 = vld [vmem:[%s105] sm:$0xff]
    %107 = vrot.lane.b32.xlu0 %v106, 32
    %v108 = vpop.permute.xlu0 %107
    %vm109 = vcmask 261120
    %s110 = scalar_lea.vmem [#allocation0], 67
    %111 = vst.msk [vmem:[%s110] ss:$8 sm:$0xf] %vm109, %v108
    %s112 = scalar_lea.vmem [#allocation0], 67
    %113 = vst.msk [vmem:[%s112] ss:$8 sm:$0xf0] %vm109, %v108
    %s114 = scalar_lea.vmem %s0, 16
    %v115 = vld [vmem:[%s114] sm:$0xff]
    %116 = vrot.lane.b32.xlu0 %v115, 32
    %v117 = vpop.permute.xlu0 %116
    %vm118 = vcmask 261120
    %s119 = scalar_lea.vmem [#allocation0], 131
    %120 = vst.msk [vmem:[%s119] ss:$8 sm:$0xf] %vm118, %v117
    %s121 = scalar_lea.vmem [#allocation0], 131
    %122 = vst.msk [vmem:[%s121] ss:$8 sm:$0xf0] %vm118, %v117
    %s123 = scalar_lea.vmem %s0, 24
    %v124 = vld [vmem:[%s123] sm:$0xff]
    %125 = vrot.lane.b32.xlu0 %v124, 32
    %v126 = vpop.permute.xlu0 %125
    %vm127 = vcmask 261120
    %s128 = scalar_lea.vmem [#allocation0], 195
    %129 = vst.msk [vmem:[%s128] ss:$8 sm:$0xf] %vm127, %v126
    %s130 = scalar_lea.vmem [#allocation0], 195
    %131 = vst.msk [vmem:[%s130] ss:$8 sm:$0xf0] %vm127, %v126
    %s133 = ssub.s32 16, 1
    %v134 = vld [vmem:[#allocation0] sm:%s133]
    %s136 = ssub.s32 16, 1
    %137 = vst [vmem:[%s1] sm:%s136] %v134
    %s138 = scalar_lea.vmem [#allocation0], 8
    %v139 = vld [vmem:[%s138] sm:%s133]
    %s141 = ssub.s32 16, 1
    %s142 = scalar_lea.vmem %s1, 4
    %143 = vst [vmem:[%s142] sm:%s141] %v139
    %s144 = scalar_lea.vmem [#allocation0], 16
    %v145 = vld [vmem:[%s144] sm:%s133]
    %s147 = ssub.s32 16, 1
    %s148 = scalar_lea.vmem %s1, 8
    %149 = vst [vmem:[%s148] sm:%s147] %v145
    %s150 = scalar_lea.vmem [#allocation0], 24
    %v151 = vld [vmem:[%s150] sm:%s133]
    %s153 = ssub.s32 16, 1
    %s154 = scalar_lea.vmem %s1, 12
    %155 = vst [vmem:[%s154] sm:%s153] %v151
    %s156 = scalar_lea.vmem [#allocation0], 32
    %v157 = vld [vmem:[%s156] sm:%s133]
    %s159 = ssub.s32 16, 1
    %s160 = scalar_lea.vmem %s1, 16
    %161 = vst [vmem:[%s160] sm:%s159] %v157
    %s162 = scalar_lea.vmem [#allocation0], 40
    %v163 = vld [vmem:[%s162] sm:%s133]
    %s165 = ssub.s32 16, 1
    %s166 = scalar_lea.vmem %s1, 20
    %167 = vst [vmem:[%s166] sm:%s165] %v163
    %s168 = scalar_lea.vmem [#allocation0], 48
    %v169 = vld [vmem:[%s168] sm:%s133]
    %s171 = ssub.s32 16, 1
    %s172 = scalar_lea.vmem %s1, 24
    %173 = vst [vmem:[%s172] sm:%s171] %v169
    %s174 = scalar_lea.vmem [#allocation0], 56
    %v175 = vld [vmem:[%s174] sm:%s133]
    %s177 = ssub.s32 16, 1
    %s178 = scalar_lea.vmem %s1, 28
    %179 = vst [vmem:[%s178] sm:%s177] %v175
    %s180 = scalar_lea.vmem [#allocation0], 64
    %v181 = vld [vmem:[%s180] sm:%s133]
    %s183 = ssub.s32 16, 1
    %s184 = scalar_lea.vmem %s1, 32
    %185 = vst [vmem:[%s184] sm:%s183] %v181
    %s186 = scalar_lea.vmem [#allocation0], 72
    %v187 = vld [vmem:[%s186] sm:%s133]
    %s189 = ssub.s32 16, 1
    %s190 = scalar_lea.vmem %s1, 36
    %191 = vst [vmem:[%s190] sm:%s189] %v187
    %s192 = scalar_lea.vmem [#allocation0], 80
    %v193 = vld [vmem:[%s192] sm:%s133]
    %s195 = ssub.s32 16, 1
    %s196 = scalar_lea.vmem %s1, 40
    %197 = vst [vmem:[%s196] sm:%s195] %v193
    %s198 = scalar_lea.vmem [#allocation0], 88
    %v199 = vld [vmem:[%s198] sm:%s133]
    %s201 = ssub.s32 16, 1
    %s202 = scalar_lea.vmem %s1, 44
    %203 = vst [vmem:[%s202] sm:%s201] %v199
    %s204 = scalar_lea.vmem [#allocation0], 96
    %v205 = vld [vmem:[%s204] sm:%s133]
    %s207 = ssub.s32 16, 1
    %s208 = scalar_lea.vmem %s1, 48
    %209 = vst [vmem:[%s208] sm:%s207] %v205
    %s210 = scalar_lea.vmem [#allocation0], 104
    %v211 = vld [vmem:[%s210] sm:%s133]
    %s213 = ssub.s32 16, 1
    %s214 = scalar_lea.vmem %s1, 52
    %215 = vst [vmem:[%s214] sm:%s213] %v211
    %s216 = scalar_lea.vmem [#allocation0], 112
    %v217 = vld [vmem:[%s216] sm:%s133]
    %s219 = ssub.s32 16, 1
    %s220 = scalar_lea.vmem %s1, 56
    %221 = vst [vmem:[%s220] sm:%s219] %v217
    %s222 = scalar_lea.vmem [#allocation0], 120
    %v223 = vld [vmem:[%s222] sm:%s133]
    %s225 = ssub.s32 16, 1
    %s226 = scalar_lea.vmem %s1, 60
    %227 = vst [vmem:[%s226] sm:%s225] %v223
    %s228 = scalar_lea.vmem [#allocation0], 128
    %v229 = vld [vmem:[%s228] sm:%s133]
    %s231 = ssub.s32 16, 1
    %s232 = scalar_lea.vmem %s1, 64
    %233 = vst [vmem:[%s232] sm:%s231] %v229
    %s234 = scalar_lea.vmem [#allocation0], 136
    %v235 = vld [vmem:[%s234] sm:%s133]
    %s237 = ssub.s32 16, 1
    %s238 = scalar_lea.vmem %s1, 68
    %239 = vst [vmem:[%s238] sm:%s237] %v235
    %s240 = scalar_lea.vmem [#allocation0], 144
    %v241 = vld [vmem:[%s240] sm:%s133]
    %s243 = ssub.s32 16, 1
    %s244 = scalar_lea.vmem %s1, 72
    %245 = vst [vmem:[%s244] sm:%s243] %v241
    %s246 = scalar_lea.vmem [#allocation0], 152
    %v247 = vld [vmem:[%s246] sm:%s133]
    %s249 = ssub.s32 16, 1
    %s250 = scalar_lea.vmem %s1, 76
    %251 = vst [vmem:[%s250] sm:%s249] %v247
    %s252 = scalar_lea.vmem [#allocation0], 160
    %v253 = vld [vmem:[%s252] sm:%s133]
    %s255 = ssub.s32 16, 1
    %s256 = scalar_lea.vmem %s1, 80
    %257 = vst [vmem:[%s256] sm:%s255] %v253
    %s258 = scalar_lea.vmem [#allocation0], 168
    %v259 = vld [vmem:[%s258] sm:%s133]
    %s261 = ssub.s32 16, 1
    %s262 = scalar_lea.vmem %s1, 84
    %263 = vst [vmem:[%s262] sm:%s261] %v259
    %s264 = scalar_lea.vmem [#allocation0], 176
    %v265 = vld [vmem:[%s264] sm:%s133]
    %s267 = ssub.s32 16, 1
    %s268 = scalar_lea.vmem %s1, 88
    %269 = vst [vmem:[%s268] sm:%s267] %v265
    %s270 = scalar_lea.vmem [#allocation0], 184
    %v271 = vld [vmem:[%s270] sm:%s133]
    %s273 = ssub.s32 16, 1
    %s274 = scalar_lea.vmem %s1, 92
    %275 = vst [vmem:[%s274] sm:%s273] %v271
    %s276 = scalar_lea.vmem [#allocation0], 192
    %v277 = vld [vmem:[%s276] sm:%s133]
    %s279 = ssub.s32 16, 1
    %s280 = scalar_lea.vmem %s1, 96
    %281 = vst [vmem:[%s280] sm:%s279] %v277
    %s282 = scalar_lea.vmem [#allocation0], 200
    %v283 = vld [vmem:[%s282] sm:%s133]
    %s285 = ssub.s32 16, 1
    %s286 = scalar_lea.vmem %s1, 100
    %287 = vst [vmem:[%s286] sm:%s285] %v283
    %s288 = scalar_lea.vmem [#allocation0], 208
    %v289 = vld [vmem:[%s288] sm:%s133]
    %s291 = ssub.s32 16, 1
    %s292 = scalar_lea.vmem %s1, 104
    %293 = vst [vmem:[%s292] sm:%s291] %v289
    %s294 = scalar_lea.vmem [#allocation0], 216
    %v295 = vld [vmem:[%s294] sm:%s133]
    %s297 = ssub.s32 16, 1
    %s298 = scalar_lea.vmem %s1, 108
    %299 = vst [vmem:[%s298] sm:%s297] %v295
    %s300 = scalar_lea.vmem [#allocation0], 224
    %v301 = vld [vmem:[%s300] sm:%s133]
    %s303 = ssub.s32 16, 1
    %s304 = scalar_lea.vmem %s1, 112
    %305 = vst [vmem:[%s304] sm:%s303] %v301
    %s306 = scalar_lea.vmem [#allocation0], 232
    %v307 = vld [vmem:[%s306] sm:%s133]
    %s309 = ssub.s32 16, 1
    %s310 = scalar_lea.vmem %s1, 116
    %311 = vst [vmem:[%s310] sm:%s309] %v307
    %s312 = scalar_lea.vmem [#allocation0], 240
    %v313 = vld [vmem:[%s312] sm:%s133]
    %s315 = ssub.s32 16, 1
    %s316 = scalar_lea.vmem %s1, 120
    %317 = vst [vmem:[%s316] sm:%s315] %v313
    %s318 = scalar_lea.vmem [#allocation0], 248
    %v319 = vld [vmem:[%s318] sm:%s133]
    %s321 = ssub.s32 16, 1
    %s322 = scalar_lea.vmem %s1, 124
    %323 = vst [vmem:[%s322] sm:%s321] %v319

// kernel: multi_head_attention.5
$region0: #{multi_head_attention.5}
  #allocation0 [shape = 'u32[]', space=smem, size = 0x4, offset = 0x4, fixed_abs, tag = 'smem constant byte address 0x4 - core index']
  #allocation1 [shape = 'u32[72,128]{1,0:T(1,128)}', space=vmem, size = 0x9000, scoped, tag = 'internal scratch']
  #allocation2 [shape = 'f32[32,128]{1,0:T(8,128)}', space=vmem, size = 0x4000, scoped, tag = 'scratch operand']
  %s0 = inlined_call_operand.vmem [shape: f32[1,32,128], index: 0, kind: input, shape index: {}]
  %s1 = inlined_call_operand.vmem [shape: f32[1,128,128], index: 1, kind: input, shape index: {}]
  %s2 = inlined_call_operand.vmem [shape: f32[1,1,128], index: 2, kind: input, shape index: {}]
  %s3 = inlined_call_operand.hbm [shape: f32[1,32,128], index: 3, kind: output, shape index: {}]
  %s4 = sld [smem:[#allocation0]]
  $region30: #{multi_head_attention.5} parent=0
    _
  %s6 = ssub.s32 1, %s4
  %s7 = scalar_select 0, %s6, %s4
  $region1: #{multi_head_attention.5} parent=0
    #allocation3 [shape = 'u8[16384]{0}', space=vmem, size = 0x4000, scoped, tag = 'output window, operand 0, single buffered']
    #allocation4 [shape = 's32[1]{0}', space=sflag, size = 0x4, scoped, tag = 'scoped memory for multi_head_attention.5']
    %8 = vsyncpa [#allocation4], 0
    // Predicated region
    $region2: #{multi_head_attention.5} parent=1 // pred_check
      _
    $region3: #{multi_head_attention.5} parent=1 // pred_check_branch
      %10 = sbr.rel (0) target = $region5
    $region4: #{multi_head_attention.5} parent=1 // pred_region
      _
    $region5: #{multi_head_attention.5} parent=1 // pred_fallthru
      _
    // Predicated region
    $region6: #{multi_head_attention.5} parent=1 // pred_check
      _
    $region7: #{multi_head_attention.5} parent=1 // pred_check_branch
      %12 = sbr.rel (0) target = $region9
    $region8: #{multi_head_attention.5} parent=1 // pred_region
      _
    $region9: #{multi_head_attention.5} parent=1 // pred_fallthru
      _
    // Predicated region
    $region10: #{multi_head_attention.5} parent=1 // pred_check
      _
    $region11: #{multi_head_attention.5} parent=1 // pred_check_branch
      %14 = sbr.rel (0) target = $region13
    $region12: #{multi_head_attention.5} parent=1 // pred_region
      _
    $region13: #{multi_head_attention.5} parent=1 // pred_fallthru
      _
    %p15 = scmp.eq.s32.totalorder 0, 0
    // Predicated region
    $region14: #{multi_head_attention.5} parent=1 // pred_check
      %p16 = pneg %p15
    $region15: #{multi_head_attention.5} parent=1 // pred_check_branch
      %18 = sbr.rel (%p16) target = $region17
    $region16: #{multi_head_attention.5} parent=1 // pred_region
      %v19 = vld [vmem:[%s2] sm:$0x1]
      %v21 = vperm.slane %v19, 0
      %23 = vst [vmem:[#allocation2] sm:$0xff] %v21
      %24 = vst [vmem:[#allocation2 + $0x8] sm:$0xff] %v21
      %25 = vst [vmem:[#allocation2 + $0x10] sm:$0xff] %v21
      %26 = vst [vmem:[#allocation2 + $0x18] sm:$0xff] %v21
    $region17: #{multi_head_attention.5} parent=1 // pred_fallthru
      _
    %v27 = vld [vmem:[#allocation2] sm:$0xff]
    %v28 = vld [vmem:[#allocation2 + $0x8] sm:$0xff]
    %v29 = vld [vmem:[#allocation2 + $0x10] sm:$0xff]
    %v30 = vld [vmem:[#allocation2 + $0x18] sm:$0xff]
    %v31 = vld [vmem:[%s0] sm:$0xff]
    %v32 = vld [vmem:[%s0 + $0x8] sm:$0xff]
    %v33 = vld [vmem:[%s0 + $0x10] sm:$0xff]
    %v34 = vld [vmem:[%s0 + $0x18] sm:$0xff]
    %v35 = vld [vmem:[%s1] sm:$0xff]
    %v36 = vld [vmem:[%s1 + $0x8] sm:$0xff]
    %v37 = vld [vmem:[%s1 + $0x10] sm:$0xff]
    %v38 = vld [vmem:[%s1 + $0x18] sm:$0xff]
    %v39 = vld [vmem:[%s1 + $0x20] sm:$0xff]
    %v40 = vld [vmem:[%s1 + $0x28] sm:$0xff]
    %v41 = vld [vmem:[%s1 + $0x30] sm:$0xff]
    %v42 = vld [vmem:[%s1 + $0x38] sm:$0xff]
    %v43 = vld [vmem:[%s1 + $0x40] sm:$0xff]
    %v44 = vld [vmem:[%s1 + $0x48] sm:$0xff]
    %v45 = vld [vmem:[%s1 + $0x50] sm:$0xff]
    %v46 = vld [vmem:[%s1 + $0x58] sm:$0xff]
    %v47 = vld [vmem:[%s1 + $0x60] sm:$0xff]
    %v48 = vld [vmem:[%s1 + $0x68] sm:$0xff]
    %v49 = vld [vmem:[%s1 + $0x70] sm:$0xff]
    %v50 = vld [vmem:[%s1 + $0x78] sm:$0xff]
    %51 = vmatpush.msra.mxu0 %v50
    %52 = vmatpush.msra.mxu0 %v49
    %53 = vmatpush.msra.mxu0 %v48
    %54 = vmatpush.msra.mxu0 %v47
    %55 = vmatpush.msra.mxu0 %v46
    %56 = vmatpush.msra.mxu0 %v45
    %57 = vmatpush.msra.mxu0 %v44
    %58 = vmatpush.msra.mxu0 %v43
    %59 = vmatpush.msra.mxu0 %v42
    %60 = vmatpush.msra.mxu0 %v41
    %61 = vmatpush.msra.mxu0 %v40
    %62 = vmatpush.msra.mxu0 %v39
    %63 = vmatpush.msra.mxu0 %v38
    %64 = vmatpush.msra.mxu0 %v37
    %65 = vmatpush.msra.mxu0 %v36
    %66 = vmatpush.msra.mxu0 %v35
    %67 = vmatmul.f32.gmra.mxu0 %v31
    %v68 = vpop.f32.mrf.mxu0
    %v69 = vadd.f32 0.0, %v68
    %70 = vmatmul.f32.gmra.mxu0 %v32
    %v71 = vpop.f32.mrf.mxu0
    %v72 = vadd.f32 0.0, %v71
    %73 = vmatmul.f32.gmra.mxu0 %v33
    %v74 = vpop.f32.mrf.mxu0
    %v75 = vadd.f32 0.0, %v74
    %76 = vmatmul.f32.gmra.mxu0 %v34
    %v77 = vpop.f32.mrf.mxu0
    %v78 = vadd.f32 0.0, %v77
    %79 = vdwg.mxu0
    %v80 = vadd.f32 %v27, %v69
    %v81 = vadd.f32 %v28, %v72
    %v82 = vadd.f32 %v29, %v75
    %v83 = vadd.f32 %v30, %v78
    %84 = vst [vmem:[#allocation2] sm:$0xff] %v80
    %85 = vst [vmem:[#allocation2 + $0x8] sm:$0xff] %v81
    %86 = vst [vmem:[#allocation2 + $0x10] sm:$0xff] %v82
    %87 = vst [vmem:[#allocation2 + $0x18] sm:$0xff] %v83
    // Predicated region
    $region18: #{multi_head_attention.5} parent=1 // pred_check
      %p88 = pneg %p15
    $region19: #{multi_head_attention.5} parent=1 // pred_check_branch
      %90 = sbr.rel (%p88) target = $region21
    $region20: #{multi_head_attention.5} parent=1 // pred_region
      %v91 = vld [vmem:[#allocation2] sm:$0xff]
      %v92 = vld [vmem:[#allocation2 + $0x8] sm:$0xff]
      %v93 = vld [vmem:[#allocation2 + $0x10] sm:$0xff]
      %v94 = vld [vmem:[#allocation2 + $0x18] sm:$0xff]
      %95 = vst [vmem:[#allocation3] sm:$0xff] %v91
      %96 = vst [vmem:[#allocation3 + $0x8] sm:$0xff] %v92
      %97 = vst [vmem:[#allocation3 + $0x10] sm:$0xff] %v93
      %98 = vst [vmem:[#allocation3 + $0x18] sm:$0xff] %v94
    $region21: #{multi_head_attention.5} parent=1 // pred_fallthru
      _
    // Predicated region
    $region22: #{multi_head_attention.5} parent=1 // pred_check
      _
    $region23: #{multi_head_attention.5} parent=1 // pred_check_branch
      %100 = sbr.rel (0) target = $region25
    $region24: #{multi_head_attention.5} parent=1 // pred_region
      %102 = vsyncadd [#allocation4], 0
      %s103 = sshll.u32 [#allocation3], 4
      %s104 = int_to_ptr.vmem [resolvable:$true] %s103
      %s105 = sshll.u32 %s3, 4
      %s106 = int_to_ptr.hbm [resolvable:$true] %s105
      %111 = dma.vmem_to_hbm [thread:$0]  %s104, 512, %s106, [#allocation4], 128, 128, 8
    $region25: #{multi_head_attention.5} parent=1 // pred_fallthru
      _
    // Predicated region
    $region26: #{multi_head_attention.5} parent=1 // pred_check
      _
    $region27: #{multi_head_attention.5} parent=1 // pred_check_branch
      %113 = sbr.rel (0) target = $region29
    $region28: #{multi_head_attention.5} parent=1 // pred_region
      %115 = dma.done [#allocation4], 512
    $region29: #{multi_head_attention.5} parent=1 // pred_fallthru
      _
    %116 = vsyncpa [#allocation4], 1

// kernel: multi_head_attention.3
$region0: #{multi_head_attention.3}
  #allocation0 [shape = 'u32[]', space=smem, size = 0x4, offset = 0x4, fixed_abs, tag = 'smem constant byte address 0x4 - core index']
  #allocation1 [shape = 'u32[72,128]{1,0:T(1,128)}', space=vmem, size = 0x9000, scoped, tag = 'internal scratch']
  #allocation2 [shape = 'f32[32,128]{1,0:T(8,128)}', space=vmem, size = 0x4000, scoped, tag = 'scratch operand']
  %s0 = inlined_call_operand.vmem [shape: f32[3,32,128], index: 0, kind: input, shape index: {}]
  %s1 = inlined_call_operand.vmem [shape: f32[3,128,128], index: 1, kind: input, shape index: {}]
  %s2 = inlined_call_operand.vmem [shape: f32[3,1,128], index: 2, kind: input, shape index: {}]
  %s3 = inlined_call_operand.vmem [shape: f32[3,32,128], index: 3, kind: output, shape index: {}]
  %s4 = sld [smem:[#allocation0]]
  $region53: #{multi_head_attention.3} parent=0
    _
  %s6 = ssub.s32 1, %s4
  %s7 = scalar_select 0, %s6, %s4
  loop: start=0, step=1, limit=5
  $region2: #{multi_head_attention.3} parent=0 // loop_pre_header
    _
  $region3: #{multi_head_attention.3} parent=0 // loop_header
    %s9 = sphi 0, %s13
    %p10 = scmp.ge.s32.totalorder %s9, 5
    %s16 = sphi 0, %s42
    %s17 = sphi 0, %s38
    %s18 = sphi 0, %s34
    %s19 = sphi 0, %s30
    %s20 = sphi 0, %s16
    %s21 = sphi 0, %s17
    %s22 = sphi 0, %s18
    %s23 = sphi 0, %s19
    %s24 = sphi 0, %s20
    %s25 = sphi 0, %s21
    %s26 = sphi 0, %s22
    %s27 = sphi 0, %s23
    %s49 = sphi 0, %s51
    %s52 = sphi 0, %s49
    %s53 = sphi 0, %s52
    %s69 = sphi 0, %s53
    %s79 = sphi 0, %s81
    %s82 = sphi 0, %s79
    %s83 = sphi 0, %s82
    %s99 = sphi 0, %s83
    %s107 = sphi 0, %s109
    %s110 = sphi 0, %s107
    %s111 = sphi 0, %s110
    %s127 = sphi 0, %s111
    %s137 = sphi 0, %s139
    %s140 = sphi 0, %s137
    %s141 = sphi 0, %s140
    %s157 = sphi 0, %s141
  $region4: #{multi_head_attention.3} parent=0 // loop_header_branch
    %12 = sbr.rel (%p10) target = $region8
  $region5: #{multi_head_attention.3} parent=0 // loop_body
    %s14 = ssub.s32 %s9, 1
    %s15 = ssub.s32 %s9, 2
    %s28 = sadd.s32 1, %s19
    %p29 = scmp.ge.s32.totalorder %s28, 1
    %s30 = scalar_select %p29, 0, %s28
    %s31 = sadd.s32 1, %s18
    %s32 = scalar_select %p29, %s31, %s18
    %p33 = scmp.ge.s32.totalorder %s32, 1
    %s34 = scalar_select %p33, 0, %s32
    %s35 = sadd.s32 1, %s17
    %s36 = scalar_select %p33, %s35, %s17
    %p37 = scmp.ge.s32.totalorder %s36, 1
    %s38 = scalar_select %p37, 0, %s36
    %s39 = sadd.s32 1, %s16
    %s40 = scalar_select %p37, %s39, %s16
    %p41 = scmp.ge.s32.totalorder %s40, 3
    %s42 = scalar_select %p41, 0, %s40
    %s43 = ssub.s32 %s16, %s42
    %s44 = ssub.s32 %s17, %s38
    %s45 = sor.u32 %s43, %s44
    %s46 = ssub.s32 %s19, %s30
    %s47 = sor.u32 %s45, %s46
    %p48 = scmp.eq.s32.totalorder %s47, 0
    %s50 = sadd.s32 %s49, 1
    %s51 = scalar_select %p48, %s49, %s50
    %p54 = pneg %p48
    %p55 = scmp.eq.s32.totalorder %s9, 2
    %p56 = por %p54, %p55
    %p57 = scmp.ne.s32.totalorder %s49, %s52
    %p58 = scmp.eq.s32.totalorder %s9, 0
    %p59 = por %p57, %p58
    %p60 = scmp.ne.s32.totalorder %s49, %s52
    %p61 = scmp.eq.s32.totalorder %s14, 2
    %p62 = por %p60, %p61
    %p63 = scmp.ne.s32.totalorder %s52, %s53
    %p64 = scmp.eq.s32.totalorder %s14, 0
    %p65 = por %p63, %p64
    %p66 = scmp.ne.s32.totalorder %s52, %s53
    %p67 = scmp.eq.s32.totalorder %s15, 2
    %p68 = por %p66, %p67
    %p70 = scmp.ne.s32.totalorder %s53, %s69
    %p71 = scmp.eq.s32.totalorder %s15, 0
    %p72 = por %p70, %p71
    %s73 = ssub.s32 %s16, %s42
    %s74 = ssub.s32 %s19, %s30
    %s75 = sor.u32 %s73, %s74
    %s76 = ssub.s32 %s18, %s34
    %s77 = sor.u32 %s75, %s76
    %p78 = scmp.eq.s32.totalorder %s77, 0
    %s80 = sadd.s32 %s79, 1
    %s81 = scalar_select %p78, %s79, %s80
    %p84 = pneg %p78
    %p85 = scmp.eq.s32.totalorder %s9, 2
    %p86 = por %p84, %p85
    %p87 = scmp.ne.s32.totalorder %s79, %s82
    %p88 = scmp.eq.s32.totalorder %s9, 0
    %p89 = por %p87, %p88
    %p90 = scmp.ne.s32.totalorder %s79, %s82
    %p91 = scmp.eq.s32.totalorder %s14, 2
    %p92 = por %p90, %p91
    %p93 = scmp.ne.s32.totalorder %s82, %s83
    %p94 = scmp.eq.s32.totalorder %s14, 0
    %p95 = por %p93, %p94
    %p96 = scmp.ne.s32.totalorder %s82, %s83
    %p97 = scmp.eq.s32.totalorder %s15, 2
    %p98 = por %p96, %p97
    %p100 = scmp.ne.s32.totalorder %s83, %s99
    %p101 = scmp.eq.s32.totalorder %s15, 0
    %p102 = por %p100, %p101
    %s103 = ssub.s32 %s16, %s42
    %s104 = ssub.s32 %s18, %s34
    %s105 = sor.u32 %s103, %s104
    %p106 = scmp.eq.s32.totalorder %s105, 0
    %s108 = sadd.s32 %s107, 1
    %s109 = scalar_select %p106, %s107, %s108
    %p112 = pneg %p106
    %p113 = scmp.eq.s32.totalorder %s9, 2
    %p114 = por %p112, %p113
    %p115 = scmp.ne.s32.totalorder %s107, %s110
    %p116 = scmp.eq.s32.totalorder %s9, 0
    %p117 = por %p115, %p116
    %p118 = scmp.ne.s32.totalorder %s107, %s110
    %p119 = scmp.eq.s32.totalorder %s14, 2
    %p120 = por %p118, %p119
    %p121 = scmp.ne.s32.totalorder %s110, %s111
    %p122 = scmp.eq.s32.totalorder %s14, 0
    %p123 = por %p121, %p122
    %p124 = scmp.ne.s32.totalorder %s110, %s111
    %p125 = scmp.eq.s32.totalorder %s15, 2
    %p126 = por %p124, %p125
    %p128 = scmp.ne.s32.totalorder %s111, %s127
    %p129 = scmp.eq.s32.totalorder %s15, 0
    %p130 = por %p128, %p129
    %s131 = ssub.s32 %s16, %s42
    %s132 = ssub.s32 %s17, %s38
    %s133 = sor.u32 %s131, %s132
    %s134 = ssub.s32 %s18, %s34
    %s135 = sor.u32 %s133, %s134
    %p136 = scmp.eq.s32.totalorder %s135, 0
    %s138 = sadd.s32 %s137, 1
    %s139 = scalar_select %p136, %s137, %s138
    %p142 = pneg %p136
    %p143 = scmp.eq.s32.totalorder %s9, 2
    %p144 = por %p142, %p143
    %p145 = scmp.ne.s32.totalorder %s137, %s140
    %p146 = scmp.eq.s32.totalorder %s9, 0
    %p147 = por %p145, %p146
    %p148 = scmp.ne.s32.totalorder %s137, %s140
    %p149 = scmp.eq.s32.totalorder %s14, 2
    %p150 = por %p148, %p149
    %p151 = scmp.ne.s32.totalorder %s140, %s141
    %p152 = scmp.eq.s32.totalorder %s14, 0
    %p153 = por %p151, %p152
    %p154 = scmp.ne.s32.totalorder %s140, %s141
    %p155 = scmp.eq.s32.totalorder %s15, 2
    %p156 = por %p154, %p155
    %p158 = scmp.ne.s32.totalorder %s141, %s157
    %p159 = scmp.eq.s32.totalorder %s15, 0
    %p160 = por %p158, %p159
    %p161 = scmp.le.s32.totalorder 1, %s9
    %p162 = scmp.lt.s32.totalorder %s9, 4
    %p163 = pnand %p161, %p162
    %p164 = pneg %p163
    // Predicated region
    $region9: #{multi_head_attention.3} parent=5 // pred_check
      _
    $region10: #{multi_head_attention.3} parent=5 // pred_check_branch
      %166 = sbr.rel (%p163) target = $region12
    $region11: #{multi_head_attention.3} parent=5 // pred_region
      %s167 = ssub.s32 %s9, 1
    $region12: #{multi_head_attention.3} parent=5 // pred_fallthru
      _
    %p168 = scmp.lt.s32.totalorder %s9, 3
    // Predicated region
    $region13: #{multi_head_attention.3} parent=5 // pred_check
      %p169 = pneg %p168
    $region14: #{multi_head_attention.3} parent=5 // pred_check_branch
      %171 = sbr.rel (%p169) target = $region16
    $region15: #{multi_head_attention.3} parent=5 // pred_region
      // Predicated region
      $region17: #{multi_head_attention.3} parent=15 // pred_check
        %p172 = pneg %p59
      $region18: #{multi_head_attention.3} parent=15 // pred_check_branch
        %174 = sbr.rel (%p172) target = $region20
      $region19: #{multi_head_attention.3} parent=15 // pred_region
        %s175 = smul.u32 4, %s17
        %p176 = scmp.lt.s32.totalorder %s16, 2
        %s177 = scalar_select %p176, %s16, 2
        %p178 = scmp.lt.s32.totalorder %s175, 3
        %s179 = scalar_select %p178, %s175, 3
        %p180 = scmp.lt.s32.totalorder %s19, 0
        %s181 = scalar_select %p180, %s19, 0
        %s182 = sadd.s32 %s181, %s179
        %s183 = smul.addr %s177, 4
        %s184 = sadd.s32 %s182, %s183
        %s185 = smul.addr %s184, 8
        %s186 = scalar_lea.vmem %s0, %s185
        %s187 = smul.u32 4, %s17
      $region20: #{multi_head_attention.3} parent=15 // pred_fallthru
        _
      // Predicated region
      $region21: #{multi_head_attention.3} parent=15 // pred_check
        %p188 = pneg %p89
      $region22: #{multi_head_attention.3} parent=15 // pred_check_branch
        %190 = sbr.rel (%p188) target = $region24
      $region23: #{multi_head_attention.3} parent=15 // pred_region
        %s191 = smul.u32 16, %s19
        %p192 = scmp.lt.s32.totalorder %s16, 2
        %s193 = scalar_select %p192, %s16, 2
        %p194 = scmp.lt.s32.totalorder %s191, 15
        %s195 = scalar_select %p194, %s191, 15
        %p196 = scmp.lt.s32.totalorder %s18, 0
        %s197 = scalar_select %p196, %s18, 0
        %s198 = sadd.s32 %s197, %s195
        %s199 = smul.addr %s193, 16
        %s200 = sadd.s32 %s198, %s199
        %s201 = smul.addr %s200, 8
        %s202 = scalar_lea.vmem %s1, %s201
        %s203 = smul.u32 16, %s19
      $region24: #{multi_head_attention.3} parent=15 // pred_fallthru
        _
      // Predicated region
      $region25: #{multi_head_attention.3} parent=15 // pred_check
        %p204 = pneg %p117
      $region26: #{multi_head_attention.3} parent=15 // pred_check_branch
        %206 = sbr.rel (%p204) target = $region28
      $region27: #{multi_head_attention.3} parent=15 // pred_region
        %p207 = scmp.lt.s32.totalorder %s16, 2
        %s208 = scalar_select %p207, %s16, 2
        %p209 = scmp.lt.s32.totalorder %s18, 0
        %s210 = scalar_select %p209, %s18, 0
        %s211 = sadd.s32 %s210, %s208
        %s212 = scalar_lea.vmem %s2, %s211
      $region28: #{multi_head_attention.3} parent=15 // pred_fallthru
        _
    $region16: #{multi_head_attention.3} parent=5 // pred_fallthru
      _
    %p213 = scmp.le.s32.totalorder 1, %s9
    %p214 = scmp.lt.s32.totalorder %s9, 4
    %p215 = pnand %p213, %p214
    %p216 = pneg %p215
    // Predicated region
    $region29: #{multi_head_attention.3} parent=5 // pred_check
      _
    $region30: #{multi_head_attention.3} parent=5 // pred_check_branch
      %218 = sbr.rel (%p215) target = $region32
    $region31: #{multi_head_attention.3} parent=5 // pred_region
      %s219 = ssub.s32 %s9, 1
      %s220 = smul.u32 4, %s21
      %p221 = scmp.lt.s32.totalorder %s20, 2
      %s222 = scalar_select %p221, %s20, 2
      %p223 = scmp.lt.s32.totalorder %s220, 3
      %s224 = scalar_select %p223, %s220, 3
      %p225 = scmp.lt.s32.totalorder %s23, 0
      %s226 = scalar_select %p225, %s23, 0
      %s227 = sadd.s32 %s226, %s224
      %s228 = smul.addr %s222, 4
      %s229 = sadd.s32 %s227, %s228
      %s230 = smul.addr %s229, 8
      %s231 = scalar_lea.vmem %s0, %s230
      %p232 = pneg %p65
      %p233 = pneg %p62
      %s234 = smul.u32 16, %s23
      %p235 = scmp.lt.s32.totalorder %s20, 2
      %s236 = scalar_select %p235, %s20, 2
      %p237 = scmp.lt.s32.totalorder %s234, 15
      %s238 = scalar_select %p237, %s234, 15
      %p239 = scmp.lt.s32.totalorder %s22, 0
      %s240 = scalar_select %p239, %s22, 0
      %s241 = sadd.s32 %s240, %s238
      %s242 = smul.addr %s236, 16
      %s243 = sadd.s32 %s241, %s242
      %s244 = smul.addr %s243, 8
      %s245 = scalar_lea.vmem %s1, %s244
      %p246 = pneg %p95
      %p247 = pneg %p92
      %p248 = scmp.lt.s32.totalorder %s20, 2
      %s249 = scalar_select %p248, %s20, 2
      %p250 = scmp.lt.s32.totalorder %s22, 0
      %s251 = scalar_select %p250, %s22, 0
      %s252 = sadd.s32 %s251, %s249
      %s253 = scalar_lea.vmem %s2, %s252
      %p254 = pneg %p123
      %p255 = pneg %p120
      %p256 = pneg %p153
      %p257 = pneg %p150
      %s258 = smul.u32 4, %s21
      %p259 = scmp.lt.s32.totalorder %s20, 2
      %s260 = scalar_select %p259, %s20, 2
      %p261 = scmp.lt.s32.totalorder %s258, 3
      %s262 = scalar_select %p261, %s258, 3
      %p263 = scmp.lt.s32.totalorder %s22, 0
      %s264 = scalar_select %p263, %s22, 0
      %s265 = sadd.s32 %s264, %s262
      %s266 = smul.addr %s260, 4
      %s267 = sadd.s32 %s265, %s266
      %s268 = smul.addr %s267, 8
      %s269 = scalar_lea.vmem %s3, %s268
      %s270 = smul.u32 4, %s21
      %p271 = scmp.lt.s32.totalorder %s20, 2
      %s272 = scalar_select %p271, %s20, 2
      %p273 = scmp.lt.s32.totalorder %s270, 3
      %s274 = scalar_select %p273, %s270, 3
      %p275 = scmp.lt.s32.totalorder %s23, 0
      %s276 = scalar_select %p275, %s23, 0
      %s277 = sadd.s32 %s276, %s274
      %s278 = smul.addr %s272, 4
      %s279 = sadd.s32 %s277, %s278
      %s280 = smul.addr %s279, 8
      %s281 = scalar_lea.vmem %s0, %s280
      %s282 = smul.u32 4, %s21
      %s283 = smul.u32 16, %s23
      %p284 = scmp.lt.s32.totalorder %s20, 2
      %s285 = scalar_select %p284, %s20, 2
      %p286 = scmp.lt.s32.totalorder %s283, 15
      %s287 = scalar_select %p286, %s283, 15
      %p288 = scmp.lt.s32.totalorder %s22, 0
      %s289 = scalar_select %p288, %s22, 0
      %s290 = sadd.s32 %s289, %s287
      %s291 = smul.addr %s285, 16
      %s292 = sadd.s32 %s290, %s291
      %s293 = smul.addr %s292, 8
      %s294 = scalar_lea.vmem %s1, %s293
      %s295 = smul.u32 16, %s23
      %p296 = scmp.lt.s32.totalorder %s20, 2
      %s297 = scalar_select %p296, %s20, 2
      %p298 = scmp.lt.s32.totalorder %s22, 0
      %s299 = scalar_select %p298, %s22, 0
      %s300 = sadd.s32 %s299, %s297
      %s301 = scalar_lea.vmem %s2, %s300
      %s302 = smul.u32 4, %s21
      %p303 = scmp.lt.s32.totalorder %s20, 2
      %s304 = scalar_select %p303, %s20, 2
      %p305 = scmp.lt.s32.totalorder %s302, 3
      %s306 = scalar_select %p305, %s302, 3
      %p307 = scmp.lt.s32.totalorder %s22, 0
      %s308 = scalar_select %p307, %s22, 0
      %s309 = sadd.s32 %s308, %s306
      %s310 = smul.addr %s304, 4
      %s311 = sadd.s32 %s309, %s310
      %s312 = smul.addr %s311, 8
      %s313 = scalar_lea.vmem %s3, %s312
      %s314 = smul.u32 4, %s21
      %p315 = scmp.eq.s32.totalorder %s23, 0
      // Predicated region
      $region33: #{multi_head_attention.3} parent=31 // pred_check
        %p316 = pneg %p315
      $region34: #{multi_head_attention.3} parent=31 // pred_check_branch
        %318 = sbr.rel (%p316) target = $region36
      $region35: #{multi_head_attention.3} parent=31 // pred_region
        %v319 = vld [vmem:[%s301] sm:$0x1]
        %v321 = vperm.slane %v319, 0
        %323 = vst [vmem:[#allocation2] sm:$0xff] %v321
        %324 = vst [vmem:[#allocation2 + $0x8] sm:$0xff] %v321
        %325 = vst [vmem:[#allocation2 + $0x10] sm:$0xff] %v321
        %326 = vst [vmem:[#allocation2 + $0x18] sm:$0xff] %v321
      $region36: #{multi_head_attention.3} parent=31 // pred_fallthru
        _
      %v327 = vld [vmem:[#allocation2] sm:$0xff]
      %v328 = vld [vmem:[#allocation2 + $0x8] sm:$0xff]
      %v329 = vld [vmem:[#allocation2 + $0x10] sm:$0xff]
      %v330 = vld [vmem:[#allocation2 + $0x18] sm:$0xff]
      %v331 = vld [vmem:[%s281] sm:$0xff]
      %v332 = vld [vmem:[%s281 + $0x8] sm:$0xff]
      %v333 = vld [vmem:[%s281 + $0x10] sm:$0xff]
      %v334 = vld [vmem:[%s281 + $0x18] sm:$0xff]
      %v335 = vld [vmem:[%s294] sm:$0xff]
      %v336 = vld [vmem:[%s294 + $0x8] sm:$0xff]
      %v337 = vld [vmem:[%s294 + $0x10] sm:$0xff]
      %v338 = vld [vmem:[%s294 + $0x18] sm:$0xff]
      %v339 = vld [vmem:[%s294 + $0x20] sm:$0xff]
      %v340 = vld [vmem:[%s294 + $0x28] sm:$0xff]
      %v341 = vld [vmem:[%s294 + $0x30] sm:$0xff]
      %v342 = vld [vmem:[%s294 + $0x38] sm:$0xff]
      %v343 = vld [vmem:[%s294 + $0x40] sm:$0xff]
      %v344 = vld [vmem:[%s294 + $0x48] sm:$0xff]
      %v345 = vld [vmem:[%s294 + $0x50] sm:$0xff]
      %v346 = vld [vmem:[%s294 + $0x58] sm:$0xff]
      %v347 = vld [vmem:[%s294 + $0x60] sm:$0xff]
      %v348 = vld [vmem:[%s294 + $0x68] sm:$0xff]
      %v349 = vld [vmem:[%s294 + $0x70] sm:$0xff]
      %v350 = vld [vmem:[%s294 + $0x78] sm:$0xff]
      %351 = vmatpush.msra.mxu0 %v350
      %352 = vmatpush.msra.mxu0 %v349
      %353 = vmatpush.msra.mxu0 %v348
      %354 = vmatpush.msra.mxu0 %v347
      %355 = vmatpush.msra.mxu0 %v346
      %356 = vmatpush.msra.mxu0 %v345
      %357 = vmatpush.msra.mxu0 %v344
      %358 = vmatpush.msra.mxu0 %v343
      %359 = vmatpush.msra.mxu0 %v342
      %360 = vmatpush.msra.mxu0 %v341
      %361 = vmatpush.msra.mxu0 %v340
      %362 = vmatpush.msra.mxu0 %v339
      %363 = vmatpush.msra.mxu0 %v338
      %364 = vmatpush.msra.mxu0 %v337
      %365 = vmatpush.msra.mxu0 %v336
      %366 = vmatpush.msra.mxu0 %v335
      %367 = vmatmul.f32.gmra.mxu0 %v331
      %v368 = vpop.f32.mrf.mxu0
      %v369 = vadd.f32 0.0, %v368
      %370 = vmatmul.f32.gmra.mxu0 %v332
      %v371 = vpop.f32.mrf.mxu0
      %v372 = vadd.f32 0.0, %v371
      %373 = vmatmul.f32.gmra.mxu0 %v333
      %v374 = vpop.f32.mrf.mxu0
      %v375 = vadd.f32 0.0, %v374
      %376 = vmatmul.f32.gmra.mxu0 %v334
      %v377 = vpop.f32.mrf.mxu0
      %v378 = vadd.f32 0.0, %v377
      %379 = vdwg.mxu0
      %v380 = vadd.f32 %v327, %v369
      %v381 = vadd.f32 %v328, %v372
      %v382 = vadd.f32 %v329, %v375
      %v383 = vadd.f32 %v330, %v378
      %384 = vst [vmem:[#allocation2] sm:$0xff] %v380
      %385 = vst [vmem:[#allocation2 + $0x8] sm:$0xff] %v381
      %386 = vst [vmem:[#allocation2 + $0x10] sm:$0xff] %v382
      %387 = vst [vmem:[#allocation2 + $0x18] sm:$0xff] %v383
      // Predicated region
      $region37: #{multi_head_attention.3} parent=31 // pred_check
        %p388 = pneg %p315
      $region38: #{multi_head_attention.3} parent=31 // pred_check_branch
        %390 = sbr.rel (%p388) target = $region40
      $region39: #{multi_head_attention.3} parent=31 // pred_region
        %v391 = vld [vmem:[#allocation2] sm:$0xff]
        %v392 = vld [vmem:[#allocation2 + $0x8] sm:$0xff]
        %v393 = vld [vmem:[#allocation2 + $0x10] sm:$0xff]
        %v394 = vld [vmem:[#allocation2 + $0x18] sm:$0xff]
        %395 = vst [vmem:[%s313] sm:$0xff] %v391
        %396 = vst [vmem:[%s313 + $0x8] sm:$0xff] %v392
        %397 = vst [vmem:[%s313 + $0x10] sm:$0xff] %v393
        %398 = vst [vmem:[%s313 + $0x18] sm:$0xff] %v394
      $region40: #{multi_head_attention.3} parent=31 // pred_fallthru
        _
      %s399 = smul.u32 4, %s21
      %p400 = scmp.lt.s32.totalorder %s20, 2
      %s401 = scalar_select %p400, %s20, 2
      %p402 = scmp.lt.s32.totalorder %s399, 3
      %s403 = scalar_select %p402, %s399, 3
      %p404 = scmp.lt.s32.totalorder %s22, 0
      %s405 = scalar_select %p404, %s22, 0
      %s406 = sadd.s32 %s405, %s403
      %s407 = smul.addr %s401, 4
      %s408 = sadd.s32 %s406, %s407
      %s409 = smul.addr %s408, 8
      %s410 = scalar_lea.vmem %s3, %s409
      // Predicated region
      $region41: #{multi_head_attention.3} parent=31 // pred_check
        %p411 = pneg %p150
      $region42: #{multi_head_attention.3} parent=31 // pred_check_branch
        %413 = sbr.rel (%p411) target = $region44
      $region43: #{multi_head_attention.3} parent=31 // pred_region
        %s414 = smul.u32 4, %s21
      $region44: #{multi_head_attention.3} parent=31 // pred_fallthru
        _
    $region32: #{multi_head_attention.3} parent=5 // pred_fallthru
      _
    %p415 = scmp.le.s32.totalorder 2, %s9
    // Predicated region
    $region45: #{multi_head_attention.3} parent=5 // pred_check
      %p416 = pneg %p415
    $region46: #{multi_head_attention.3} parent=5 // pred_check_branch
      %418 = sbr.rel (%p416) target = $region48
    $region47: #{multi_head_attention.3} parent=5 // pred_region
      %s419 = ssub.s32 %s9, 2
      // Predicated region
      $region49: #{multi_head_attention.3} parent=47 // pred_check
        %p420 = pneg %p156
      $region50: #{multi_head_attention.3} parent=47 // pred_check_branch
        %422 = sbr.rel (%p420) target = $region52
      $region51: #{multi_head_attention.3} parent=47 // pred_region
        %s423 = smul.u32 4, %s25
        %p424 = scmp.lt.s32.totalorder %s24, 2
        %s425 = scalar_select %p424, %s24, 2
        %p426 = scmp.lt.s32.totalorder %s423, 3
        %s427 = scalar_select %p426, %s423, 3
        %p428 = scmp.lt.s32.totalorder %s26, 0
        %s429 = scalar_select %p428, %s26, 0
        %s430 = sadd.s32 %s429, %s427
        %s431 = smul.addr %s425, 4
        %s432 = sadd.s32 %s430, %s431
        %s433 = smul.addr %s432, 8
        %s434 = scalar_lea.vmem %s3, %s433
      $region52: #{multi_head_attention.3} parent=47 // pred_fallthru
        _
    $region48: #{multi_head_attention.3} parent=5 // pred_fallthru
      _
  $region6: #{multi_head_attention.3} parent=0 // loop_footer
    %s13 = sadd.s32 1, %s9
  $region7: #{multi_head_attention.3} parent=0 // loop_footer_branch
    %8 = sbr.rel target = $region3
  $region8: #{multi_head_attention.3} parent=0 // loop_exit
    _

// kernel: multi_head_attention.4
$region0: #{multi_head_attention.4}
  #allocation0 [shape = 'u32[]', space=smem, size = 0x4, offset = 0x4, fixed_abs, tag = 'smem constant byte address 0x4 - core index']
  #allocation1 [shape = 'u32[72,128]{1,0:T(1,128)}', space=vmem, size = 0x9000, scoped, tag = 'internal scratch']
  #allocation2 [shape = 'f32[4,16,1]{2,1,0:T(8,128)}', space=vmem, size = 0x8000, scoped, tag = 'scratch operand']
  #allocation3 [shape = 'f32[4,16,1]{2,1,0:T(8,128)}', space=vmem, size = 0x8000, scoped, tag = 'scratch operand']
  #allocation4 [shape = 'f32[4,16,32]{2,1,0:T(8,128)}', space=vmem, size = 0x8000, scoped, tag = 'scratch operand']
  %s0 = inlined_call_operand.vmem [shape: f32[2,4,16,32], index: 0, kind: input, shape index: {}]
  %s1 = inlined_call_operand.vmem [shape: f32[2,4,16,32], index: 1, kind: input, shape index: {}]
  %s2 = inlined_call_operand.vmem [shape: f32[2,4,16,32], index: 2, kind: input, shape index: {}]
  %s3 = inlined_call_operand.vmem [shape: f32[2,16,128], index: 3, kind: output, shape index: {}]
  %s4 = sld [smem:[#allocation0]]
  $region53: #{multi_head_attention.4} parent=0
    _
  %s6 = ssub.s32 1, %s4
  %s7 = scalar_select 0, %s6, %s4
  loop: start=0, step=1, limit=4
  $region2: #{multi_head_attention.4} parent=0 // loop_pre_header
    _
  $region3: #{multi_head_attention.4} parent=0 // loop_header
    %s9 = sphi 0, %s13
    %p10 = scmp.ge.s32.totalorder %s9, 4
    %s16 = sphi 0, %s35
    %s17 = sphi 0, %s31
    %s18 = sphi 0, %s27
    %s19 = sphi 0, %s16
    %s20 = sphi 0, %s17
    %s21 = sphi 0, %s18
    %s22 = sphi 0, %s19
    %s23 = sphi 0, %s20
    %s24 = sphi 0, %s21
    %s40 = sphi 0, %s42
    %s43 = sphi 0, %s40
    %s44 = sphi 0, %s43
    %s60 = sphi 0, %s44
    %s68 = sphi 0, %s70
    %s71 = sphi 0, %s68
    %s72 = sphi 0, %s71
    %s88 = sphi 0, %s72
    %s96 = sphi 0, %s98
    %s99 = sphi 0, %s96
    %s100 = sphi 0, %s99
    %s116 = sphi 0, %s100
    %s124 = sphi 0, %s126
    %s127 = sphi 0, %s124
    %s128 = sphi 0, %s127
    %s144 = sphi 0, %s128
  $region4: #{multi_head_attention.4} parent=0 // loop_header_branch
    %12 = sbr.rel (%p10) target = $region8
  $region5: #{multi_head_attention.4} parent=0 // loop_body
    %s14 = ssub.s32 %s9, 1
    %s15 = ssub.s32 %s9, 2
    %s25 = sadd.s32 1, %s18
    %p26 = scmp.ge.s32.totalorder %s25, 1
    %s27 = scalar_select %p26, 0, %s25
    %s28 = sadd.s32 1, %s17
    %s29 = scalar_select %p26, %s28, %s17
    %p30 = scmp.ge.s32.totalorder %s29, 1
    %s31 = scalar_select %p30, 0, %s29
    %s32 = sadd.s32 1, %s16
    %s33 = scalar_select %p30, %s32, %s16
    %p34 = scmp.ge.s32.totalorder %s33, 2
    %s35 = scalar_select %p34, 0, %s33
    %s36 = ssub.s32 %s16, %s35
    %s37 = ssub.s32 %s17, %s31
    %s38 = sor.u32 %s36, %s37
    %p39 = scmp.eq.s32.totalorder %s38, 0
    %s41 = sadd.s32 %s40, 1
    %s42 = scalar_select %p39, %s40, %s41
    %p45 = pneg %p39
    %p46 = scmp.eq.s32.totalorder %s9, 1
    %p47 = por %p45, %p46
    %p48 = scmp.ne.s32.totalorder %s40, %s43
    %p49 = scmp.eq.s32.totalorder %s9, 0
    %p50 = por %p48, %p49
    %p51 = scmp.ne.s32.totalorder %s40, %s43
    %p52 = scmp.eq.s32.totalorder %s14, 1
    %p53 = por %p51, %p52
    %p54 = scmp.ne.s32.totalorder %s43, %s44
    %p55 = scmp.eq.s32.totalorder %s14, 0
    %p56 = por %p54, %p55
    %p57 = scmp.ne.s32.totalorder %s43, %s44
    %p58 = scmp.eq.s32.totalorder %s15, 1
    %p59 = por %p57, %p58
    %p61 = scmp.ne.s32.totalorder %s44, %s60
    %p62 = scmp.eq.s32.totalorder %s15, 0
    %p63 = por %p61, %p62
    %s64 = ssub.s32 %s16, %s35
    %s65 = ssub.s32 %s18, %s27
    %s66 = sor.u32 %s64, %s65
    %p67 = scmp.eq.s32.totalorder %s66, 0
    %s69 = sadd.s32 %s68, 1
    %s70 = scalar_select %p67, %s68, %s69
    %p73 = pneg %p67
    %p74 = scmp.eq.s32.totalorder %s9, 1
    %p75 = por %p73, %p74
    %p76 = scmp.ne.s32.totalorder %s68, %s71
    %p77 = scmp.eq.s32.totalorder %s9, 0
    %p78 = por %p76, %p77
    %p79 = scmp.ne.s32.totalorder %s68, %s71
    %p80 = scmp.eq.s32.totalorder %s14, 1
    %p81 = por %p79, %p80
    %p82 = scmp.ne.s32.totalorder %s71, %s72
    %p83 = scmp.eq.s32.totalorder %s14, 0
    %p84 = por %p82, %p83
    %p85 = scmp.ne.s32.totalorder %s71, %s72
    %p86 = scmp.eq.s32.totalorder %s15, 1
    %p87 = por %p85, %p86
    %p89 = scmp.ne.s32.totalorder %s72, %s88
    %p90 = scmp.eq.s32.totalorder %s15, 0
    %p91 = por %p89, %p90
    %s92 = ssub.s32 %s16, %s35
    %s93 = ssub.s32 %s18, %s27
    %s94 = sor.u32 %s92, %s93
    %p95 = scmp.eq.s32.totalorder %s94, 0
    %s97 = sadd.s32 %s96, 1
    %s98 = scalar_select %p95, %s96, %s97
    %p101 = pneg %p95
    %p102 = scmp.eq.s32.totalorder %s9, 1
    %p103 = por %p101, %p102
    %p104 = scmp.ne.s32.totalorder %s96, %s99
    %p105 = scmp.eq.s32.totalorder %s9, 0
    %p106 = por %p104, %p105
    %p107 = scmp.ne.s32.totalorder %s96, %s99
    %p108 = scmp.eq.s32.totalorder %s14, 1
    %p109 = por %p107, %p108
    %p110 = scmp.ne.s32.totalorder %s99, %s100
    %p111 = scmp.eq.s32.totalorder %s14, 0
    %p112 = por %p110, %p111
    %p113 = scmp.ne.s32.totalorder %s99, %s100
    %p114 = scmp.eq.s32.totalorder %s15, 1
    %p115 = por %p113, %p114
    %p117 = scmp.ne.s32.totalorder %s100, %s116
    %p118 = scmp.eq.s32.totalorder %s15, 0
    %p119 = por %p117, %p118
    %s120 = ssub.s32 %s16, %s35
    %s121 = ssub.s32 %s17, %s31
    %s122 = sor.u32 %s120, %s121
    %p123 = scmp.eq.s32.totalorder %s122, 0
    %s125 = sadd.s32 %s124, 1
    %s126 = scalar_select %p123, %s124, %s125
    %p129 = pneg %p123
    %p130 = scmp.eq.s32.totalorder %s9, 1
    %p131 = por %p129, %p130
    %p132 = scmp.ne.s32.totalorder %s124, %s127
    %p133 = scmp.eq.s32.totalorder %s9, 0
    %p134 = por %p132, %p133
    %p135 = scmp.ne.s32.totalorder %s124, %s127
    %p136 = scmp.eq.s32.totalorder %s14, 1
    %p137 = por %p135, %p136
    %p138 = scmp.ne.s32.totalorder %s127, %s128
    %p139 = scmp.eq.s32.totalorder %s14, 0
    %p140 = por %p138, %p139
    %p141 = scmp.ne.s32.totalorder %s127, %s128
    %p142 = scmp.eq.s32.totalorder %s15, 1
    %p143 = por %p141, %p142
    %p145 = scmp.ne.s32.totalorder %s128, %s144
    %p146 = scmp.eq.s32.totalorder %s15, 0
    %p147 = por %p145, %p146
    %p148 = scmp.le.s32.totalorder 1, %s9
    %p149 = scmp.lt.s32.totalorder %s9, 3
    %p150 = pnand %p148, %p149
    %p151 = pneg %p150
    // Predicated region
    $region9: #{multi_head_attention.4} parent=5 // pred_check
      _
    $region10: #{multi_head_attention.4} parent=5 // pred_check_branch
      %153 = sbr.rel (%p150) target = $region12
    $region11: #{multi_head_attention.4} parent=5 // pred_region
      %s154 = ssub.s32 %s9, 1
    $region12: #{multi_head_attention.4} parent=5 // pred_fallthru
      _
    %p155 = scmp.lt.s32.totalorder %s9, 2
    // Predicated region
    $region13: #{multi_head_attention.4} parent=5 // pred_check
      %p156 = pneg %p155
    $region14: #{multi_head_attention.4} parent=5 // pred_check_branch
      %158 = sbr.rel (%p156) target = $region16
    $region15: #{multi_head_attention.4} parent=5 // pred_region
      // Predicated region
      $region17: #{multi_head_attention.4} parent=15 // pred_check
        %p159 = pneg %p50
      $region18: #{multi_head_attention.4} parent=15 // pred_check_branch
        %161 = sbr.rel (%p159) target = $region20
      $region19: #{multi_head_attention.4} parent=15 // pred_region
        %s162 = smul.u32 2, %s17
        %p163 = scmp.lt.s32.totalorder %s16, 1
        %s164 = scalar_select %p163, %s16, 1
        %p165 = scmp.lt.s32.totalorder %s162, 1
        %s166 = scalar_select %p165, %s162, 1
        %s167 = smul.addr %s164, 8
        %s168 = sadd.s32 %s166, %s167
        %s169 = smul.addr %s168, 8
        %s170 = scalar_lea.vmem %s0, %s169
        %s171 = smul.u32 2, %s17
      $region20: #{multi_head_attention.4} parent=15 // pred_fallthru
        _
      // Predicated region
      $region21: #{multi_head_attention.4} parent=15 // pred_check
        %p172 = pneg %p78
      $region22: #{multi_head_attention.4} parent=15 // pred_check_branch
        %174 = sbr.rel (%p172) target = $region24
      $region23: #{multi_head_attention.4} parent=15 // pred_region
        %s175 = smul.u32 2, %s18
        %p176 = scmp.lt.s32.totalorder %s16, 1
        %s177 = scalar_select %p176, %s16, 1
        %p178 = scmp.lt.s32.totalorder %s175, 1
        %s179 = scalar_select %p178, %s175, 1
        %s180 = smul.addr %s177, 8
        %s181 = sadd.s32 %s179, %s180
        %s182 = smul.addr %s181, 8
        %s183 = scalar_lea.vmem %s1, %s182
        %s184 = smul.u32 2, %s18
      $region24: #{multi_head_attention.4} parent=15 // pred_fallthru
        _
      // Predicated region
      $region25: #{multi_head_attention.4} parent=15 // pred_check
        %p185 = pneg %p106
      $region26: #{multi_head_attention.4} parent=15 // pred_check_branch
        %187 = sbr.rel (%p185) target = $region28
      $region27: #{multi_head_attention.4} parent=15 // pred_region
        %s188 = smul.u32 2, %s18
        %p189 = scmp.lt.s32.totalorder %s16, 1
        %s190 = scalar_select %p189, %s16, 1
        %p191 = scmp.lt.s32.totalorder %s188, 1
        %s192 = scalar_select %p191, %s188, 1
        %s193 = smul.addr %s190, 8
        %s194 = sadd.s32 %s192, %s193
        %s195 = smul.addr %s194, 8
        %s196 = scalar_lea.vmem %s2, %s195
        %s197 = smul.u32 2, %s18
      $region28: #{multi_head_attention.4} parent=15 // pred_fallthru
        _
    $region16: #{multi_head_attention.4} parent=5 // pred_fallthru
      _
    %p198 = scmp.le.s32.totalorder 1, %s9
    %p199 = scmp.lt.s32.totalorder %s9, 3
    %p200 = pnand %p198, %p199
    %p201 = pneg %p200
    // Predicated region
    $region29: #{multi_head_attention.4} parent=5 // pred_check
      _
    $region30: #{multi_head_attention.4} parent=5 // pred_check_branch
      %203 = sbr.rel (%p200) target = $region32
    $region31: #{multi_head_attention.4} parent=5 // pred_region
      %s204 = ssub.s32 %s9, 1
      %s205 = smul.u32 2, %s20
      %p206 = scmp.lt.s32.totalorder %s19, 1
      %s207 = scalar_select %p206, %s19, 1
      %p208 = scmp.lt.s32.totalorder %s205, 1
      %s209 = scalar_select %p208, %s205, 1
      %s210 = smul.addr %s207, 8
      %s211 = sadd.s32 %s209, %s210
      %s212 = smul.addr %s211, 8
      %s213 = scalar_lea.vmem %s0, %s212
      %p214 = pneg %p56
      %p215 = pneg %p53
      %s216 = smul.u32 2, %s21
      %p217 = scmp.lt.s32.totalorder %s19, 1
      %s218 = scalar_select %p217, %s19, 1
      %p219 = scmp.lt.s32.totalorder %s216, 1
      %s220 = scalar_select %p219, %s216, 1
      %s221 = smul.addr %s218, 8
      %s222 = sadd.s32 %s220, %s221
      %s223 = smul.addr %s222, 8
      %s224 = scalar_lea.vmem %s1, %s223
      %p225 = pneg %p84
      %p226 = pneg %p81
      %s227 = smul.u32 2, %s21
      %p228 = scmp.lt.s32.totalorder %s19, 1
      %s229 = scalar_select %p228, %s19, 1
      %p230 = scmp.lt.s32.totalorder %s227, 1
      %s231 = scalar_select %p230, %s227, 1
      %s232 = smul.addr %s229, 8
      %s233 = sadd.s32 %s231, %s232
      %s234 = smul.addr %s233, 8
      %s235 = scalar_lea.vmem %s2, %s234
      %p236 = pneg %p112
      %p237 = pneg %p109
      %p238 = pneg %p140
      %p239 = pneg %p137
      %s240 = smul.u32 2, %s20
      %p241 = scmp.lt.s32.totalorder %s19, 1
      %s242 = scalar_select %p241, %s19, 1
      %p243 = scmp.lt.s32.totalorder %s240, 1
      %s244 = scalar_select %p243, %s240, 1
      %s245 = smul.addr %s242, 2
      %s246 = sadd.s32 %s244, %s245
      %s247 = smul.addr %s246, 8
      %s248 = scalar_lea.vmem %s3, %s247
      %s249 = smul.u32 2, %s20
      %p250 = scmp.lt.s32.totalorder %s19, 1
      %s251 = scalar_select %p250, %s19, 1
      %p252 = scmp.lt.s32.totalorder %s249, 1
      %s253 = scalar_select %p252, %s249, 1
      %s254 = smul.addr %s251, 8
      %s255 = sadd.s32 %s253, %s254
      %s256 = smul.addr %s255, 8
      %s257 = scalar_lea.vmem %s0, %s256
      %s258 = smul.u32 2, %s20
      %s259 = smul.u32 2, %s21
      %p260 = scmp.lt.s32.totalorder %s19, 1
      %s261 = scalar_select %p260, %s19, 1
      %p262 = scmp.lt.s32.totalorder %s259, 1
      %s263 = scalar_select %p262, %s259, 1
      %s264 = smul.addr %s261, 8
      %s265 = sadd.s32 %s263, %s264
      %s266 = smul.addr %s265, 8
      %s267 = scalar_lea.vmem %s1, %s266
      %s268 = smul.u32 2, %s21
      %s269 = smul.u32 2, %s21
      %p270 = scmp.lt.s32.totalorder %s19, 1
      %s271 = scalar_select %p270, %s19, 1
      %p272 = scmp.lt.s32.totalorder %s269, 1
      %s273 = scalar_select %p272, %s269, 1
      %s274 = smul.addr %s271, 8
      %s275 = sadd.s32 %s273, %s274
      %s276 = smul.addr %s275, 8
      %s277 = scalar_lea.vmem %s2, %s276
      %s278 = smul.u32 2, %s21
      %s279 = smul.u32 2, %s20
      %p280 = scmp.lt.s32.totalorder %s19, 1
      %s281 = scalar_select %p280, %s19, 1
      %p282 = scmp.lt.s32.totalorder %s279, 1
      %s283 = scalar_select %p282, %s279, 1
      %s284 = smul.addr %s281, 2
      %s285 = sadd.s32 %s283, %s284
      %s286 = smul.addr %s285, 8
      %s287 = scalar_lea.vmem %s3, %s286
      %s288 = smul.u32 2, %s20
      %p289 = scmp.eq.s32.totalorder %s21, 0
      // Predicated region
      $region33: #{multi_head_attention.4} parent=31 // pred_check
        %p290 = pneg %p289
      $region34: #{multi_head_attention.4} parent=31 // pred_check_branch
        %292 = sbr.rel (%p290) target = $region36
      $region35: #{multi_head_attention.4} parent=31 // pred_region
        %vm293 = vcmask 7168
        %294 = vst.msk [vmem:[#allocation2] sm:$0xff] %vm293, -inf
        %295 = vst.msk [vmem:[#allocation2 + $0x8] sm:$0xff] %vm293, -inf
        %296 = vst.msk [vmem:[#allocation2 + $0x10] sm:$0xff] %vm293, -inf
        %297 = vst.msk [vmem:[#allocation2 + $0x18] sm:$0xff] %vm293, -inf
        %298 = vst.msk [vmem:[#allocation2 + $0x20] sm:$0xff] %vm293, -inf
        %299 = vst.msk [vmem:[#allocation2 + $0x28] sm:$0xff] %vm293, -inf
        %300 = vst.msk [vmem:[#allocation2 + $0x30] sm:$0xff] %vm293, -inf
        %301 = vst.msk [vmem:[#allocation2 + $0x38] sm:$0xff] %vm293, -inf
        %302 = vst.msk [vmem:[#allocation3] sm:$0xff] %vm293, 0.0
        %303 = vst.msk [vmem:[#allocation3 + $0x8] sm:$0xff] %vm293, 0.0
        %304 = vst.msk [vmem:[#allocation3 + $0x10] sm:$0xff] %vm293, 0.0
        %305 = vst.msk [vmem:[#allocation3 + $0x18] sm:$0xff] %vm293, 0.0
        %306 = vst.msk [vmem:[#allocation3 + $0x20] sm:$0xff] %vm293, 0.0
        %307 = vst.msk [vmem:[#allocation3 + $0x28] sm:$0xff] %vm293, 0.0
        %308 = vst.msk [vmem:[#allocation3 + $0x30] sm:$0xff] %vm293, 0.0
        %309 = vst.msk [vmem:[#allocation3 + $0x38] sm:$0xff] %vm293, 0.0
        %vm310 = vcmask 261120
        %311 = vst.msk [vmem:[#allocation4] sm:$0xff] %vm310, 0.0
        %312 = vst.msk [vmem:[#allocation4 + $0x8] sm:$0xff] %vm310, 0.0
        %313 = vst.msk [vmem:[#allocation4 + $0x10] sm:$0xff] %vm310, 0.0
        %314 = vst.msk [vmem:[#allocation4 + $0x18] sm:$0xff] %vm310, 0.0
        %315 = vst.msk [vmem:[#allocation4 + $0x20] sm:$0xff] %vm310, 0.0
        %316 = vst.msk [vmem:[#allocation4 + $0x28] sm:$0xff] %vm310, 0.0
        %317 = vst.msk [vmem:[#allocation4 + $0x30] sm:$0xff] %vm310, 0.0
        %318 = vst.msk [vmem:[#allocation4 + $0x38] sm:$0xff] %vm310, 0.0
      $region36: #{multi_head_attention.4} parent=31 // pred_fallthru
        _
      %v319 = vld [vmem:[%s257] sm:$0xff]
      %v320 = vld [vmem:[%s257 + $0x8] sm:$0xff]
      %v321 = vld [vmem:[%s257 + $0x10] sm:$0xff]
      %v322 = vld [vmem:[%s257 + $0x18] sm:$0xff]
      %v323 = vld [vmem:[%s257 + $0x20] sm:$0xff]
      %v324 = vld [vmem:[%s257 + $0x28] sm:$0xff]
      %v325 = vld [vmem:[%s257 + $0x30] sm:$0xff]
      %v326 = vld [vmem:[%s257 + $0x38] sm:$0xff]
      %v327 = vmul.f32 %v319, 0.17677669
      %v328 = vmul.f32 %v320, 0.17677669
      %v329 = vmul.f32 %v321, 0.17677669
      %v330 = vmul.f32 %v322, 0.17677669
      %v331 = vmul.f32 %v323, 0.17677669
      %v332 = vmul.f32 %v324, 0.17677669
      %v333 = vmul.f32 %v325, 0.17677669
      %v334 = vmul.f32 %v326, 0.17677669
      %v335 = vld [vmem:[%s267] sm:$0xff]
      %v336 = vld [vmem:[%s267 + $0x8] sm:$0xff]
      %v337 = vld [vmem:[%s267 + $0x10] sm:$0xff]
      %v338 = vld [vmem:[%s267 + $0x18] sm:$0xff]
      %v339 = vld [vmem:[%s267 + $0x20] sm:$0xff]
      %v340 = vld [vmem:[%s267 + $0x28] sm:$0xff]
      %v341 = vld [vmem:[%s267 + $0x30] sm:$0xff]
      %v342 = vld [vmem:[%s267 + $0x38] sm:$0xff]
      %v343 = vld [vmem:[%s277] sm:$0xff]
      %v344 = vld [vmem:[%s277 + $0x8] sm:$0xff]
      %v345 = vld [vmem:[%s277 + $0x10] sm:$0xff]
      %v346 = vld [vmem:[%s277 + $0x18] sm:$0xff]
      %v347 = vld [vmem:[%s277 + $0x20] sm:$0xff]
      %v348 = vld [vmem:[%s277 + $0x28] sm:$0xff]
      %v349 = vld [vmem:[%s277 + $0x30] sm:$0xff]
      %v350 = vld [vmem:[%s277 + $0x38] sm:$0xff]
      %vm351 = vcmask 261120
      %v353 = vsel %vm351, %v327, 0
      %v356 = vsel %vm351, %v328, 0
      %v359 = vsel %vm351, %v335, 0
      %v362 = vsel %vm351, %v336, 0
      %364 = vmatpush.xpose.msra.mxu0 0.0
      %365 = vmatpush.xpose.msra.mxu0 0.0
      %366 = vmatpush.xpose.msra.mxu0 0.0
      %367 = vmatpush.xpose.msra.mxu0 0.0
      %368 = vmatpush.xpose.msra.mxu0 0.0
      %369 = vmatpush.xpose.msra.mxu0 0.0
      %370 = vmatpush.xpose.msra.mxu0 0.0
      %371 = vmatpush.xpose.msra.mxu0 0.0
      %372 = vmatpush.xpose.msra.mxu0 0.0
      %373 = vmatpush.xpose.msra.mxu0 0.0
      %374 = vmatpush.xpose.msra.mxu0 0.0
      %375 = vmatpush.xpose.msra.mxu0 0.0
      %376 = vmatpush.xpose.msra.mxu0 0.0
      %377 = vmatpush.xpose.msra.mxu0 0.0
      %378 = vmatpush.xpose.msra.mxu0 %v362
      %379 = vmatpush.xpose.msra.mxu0 %v359
      %380 = vmatmul.f32.gmra.mxu0 %v353
      %v381 = vpop.f32.mrf.mxu0
      %v382 = vadd.f32 0.0, %v381
      %383 = vmatmul.f32.gmra.mxu0 %v356
      %v384 = vpop.f32.mrf.mxu0
      %v385 = vadd.f32 0.0, %v384
      %386 = vdwg.mxu0
      %v388 = vsel %vm351, %v329, 0
      %v391 = vsel %vm351, %v330, 0
      %v394 = vsel %vm351, %v337, 0
      %v397 = vsel %vm351, %v338, 0
      %399 = vmatpush.xpose.msra.mxu0 0.0
      %400 = vmatpush.xpose.msra.mxu0 0.0
      %401 = vmatpush.xpose.msra.mxu0 0.0
      %402 = vmatpush.xpose.msra.mxu0 0.0
      %403 = vmatpush.xpose.msra.mxu0 0.0
      %404 = vmatpush.xpose.msra.mxu0 0.0
      %405 = vmatpush.xpose.msra.mxu0 0.0
      %406 = vmatpush.xpose.msra.mxu0 0.0
      %407 = vmatpush.xpose.msra.mxu0 0.0
      %408 = vmatpush.xpose.msra.mxu0 0.0
      %409 = vmatpush.xpose.msra.mxu0 0.0
      %410 = vmatpush.xpose.msra.mxu0 0.0
      %411 = vmatpush.xpose.msra.mxu0 0.0
      %412 = vmatpush.xpose.msra.mxu0 0.0
      %413 = vmatpush.xpose.msra.mxu0 %v397
      %414 = vmatpush.xpose.msra.mxu0 %v394
      %415 = vmatmul.f32.gmra.mxu0 %v388
      %v416 = vpop.f32.mrf.mxu0
      %v417 = vadd.f32 0.0, %v416
      %418 = vmatmul.f32.gmra.mxu0 %v391
      %v419 = vpop.f32.mrf.mxu0
      %v420 = vadd.f32 0.0, %v419
      %421 = vdwg.mxu0
      %v423 = vsel %vm351, %v331, 0
      %v426 = vsel %vm351, %v332, 0
      %v429 = vsel %vm351, %v339, 0
      %v432 = vsel %vm351, %v340, 0
      %434 = vmatpush.xpose.msra.mxu0 0.0
      %435 = vmatpush.xpose.msra.mxu0 0.0
      %436 = vmatpush.xpose.msra.mxu0 0.0
      %437 = vmatpush.xpose.msra.mxu0 0.0
      %438 = vmatpush.xpose.msra.mxu0 0.0
      %439 = vmatpush.xpose.msra.mxu0 0.0
      %440 = vmatpush.xpose.msra.mxu0 0.0
      %441 = vmatpush.xpose.msra.mxu0 0.0
      %442 = vmatpush.xpose.msra.mxu0 0.0
      %443 = vmatpush.xpose.msra.mxu0 0.0
      %444 = vmatpush.xpose.msra.mxu0 0.0
      %445 = vmatpush.xpose.msra.mxu0 0.0
      %446 = vmatpush.xpose.msra.mxu0 0.0
      %447 = vmatpush.xpose.msra.mxu0 0.0
      %448 = vmatpush.xpose.msra.mxu0 %v432
      %449 = vmatpush.xpose.msra.mxu0 %v429
      %450 = vmatmul.f32.gmra.mxu0 %v423
      %v451 = vpop.f32.mrf.mxu0
      %v452 = vadd.f32 0.0, %v451
      %453 = vmatmul.f32.gmra.mxu0 %v426
      %v454 = vpop.f32.mrf.mxu0
      %v455 = vadd.f32 0.0, %v454
      %456 = vdwg.mxu0
      %v458 = vsel %vm351, %v333, 0
      %v461 = vsel %vm351, %v334, 0
      %v464 = vsel %vm351, %v341, 0
      %v467 = vsel %vm351, %v342, 0
      %469 = vmatpush.xpose.msra.mxu0 0.0
      %470 = vmatpush.xpose.msra.mxu0 0.0
      %471 = vmatpush.xpose.msra.mxu0 0.0
      %472 = vmatpush.xpose.msra.mxu0 0.0
      %473 = vmatpush.xpose.msra.mxu0 0.0
      %474 = vmatpush.xpose.msra.mxu0 0.0
      %475 = vmatpush.xpose.msra.mxu0 0.0
      %476 = vmatpush.xpose.msra.mxu0 0.0
      %477 = vmatpush.xpose.msra.mxu0 0.0
      %478 = vmatpush.xpose.msra.mxu0 0.0
      %479 = vmatpush.xpose.msra.mxu0 0.0
      %480 = vmatpush.xpose.msra.mxu0 0.0
      %481 = vmatpush.xpose.msra.mxu0 0.0
      %482 = vmatpush.xpose.msra.mxu0 0.0
      %483 = vmatpush.xpose.msra.mxu0 %v467
      %484 = vmatpush.xpose.msra.mxu0 %v464
      %485 = vmatmul.f32.gmra.mxu0 %v458
      %v486 = vpop.f32.mrf.mxu0
      %v487 = vadd.f32 0.0, %v486
      %488 = vmatmul.f32.gmra.mxu0 %v461
      %v489 = vpop.f32.mrf.mxu0
      %v490 = vadd.f32 0.0, %v489
      %491 = vdwg.mxu0
      %v492 = vld [vmem:[#allocation2] sm:$0xff]
      %v493 = vld [vmem:[#allocation2 + $0x8] sm:$0xff]
      %v494 = vld [vmem:[#allocation2 + $0x10] sm:$0xff]
      %v495 = vld [vmem:[#allocation2 + $0x18] sm:$0xff]
      %v496 = vld [vmem:[#allocation2 + $0x20] sm:$0xff]
      %v497 = vld [vmem:[#allocation2 + $0x28] sm:$0xff]
      %v498 = vld [vmem:[#allocation2 + $0x30] sm:$0xff]
      %v499 = vld [vmem:[#allocation2 + $0x38] sm:$0xff]
      %vm500 = vcmask 130048
      %v501 = vsel %vm500, %v382, -inf
      %502 = vmax.xlane.f32.xlu0 %v501
      %v503 = vpop.xlane.xlu0 %502
      %v504 = vsel %vm500, %v385, -inf
      %505 = vmax.xlane.f32.xlu0 %v504
      %v506 = vpop.xlane.xlu0 %505
      %v507 = vsel %vm500, %v417, -inf
      %508 = vmax.xlane.f32.xlu0 %v507
      %v509 = vpop.xlane.xlu0 %508
      %v510 = vsel %vm500, %v420, -inf
      %511 = vmax.xlane.f32.xlu0 %v510
      %v512 = vpop.xlane.xlu0 %511
      %v513 = vsel %vm500, %v452, -inf
      %514 = vmax.xlane.f32.xlu0 %v513
      %v515 = vpop.xlane.xlu0 %514
      %v516 = vsel %vm500, %v455, -inf
      %517 = vmax.xlane.f32.xlu0 %v516
      %v518 = vpop.xlane.xlu0 %517
      %v519 = vsel %vm500, %v487, -inf
      %520 = vmax.xlane.f32.xlu0 %v519
      %v521 = vpop.xlane.xlu0 %520
      %v522 = vsel %vm500, %v490, -inf
      %523 = vmax.xlane.f32.xlu0 %v522
      %v524 = vpop.xlane.xlu0 %523
      %v525 = vmax.f32 %v492, %v503
      %v526 = vmax.f32 %v493, %v506
      %v527 = vmax.f32 %v494, %v509
      %v528 = vmax.f32 %v495, %v512
      %v529 = vmax.f32 %v496, %v515
      %v530 = vmax.f32 %v497, %v518
      %v531 = vmax.f32 %v498, %v521
      %v532 = vmax.f32 %v499, %v524
      %v533 = vsub.f32 %v492, %v525
      %v534 = vsub.f32 %v493, %v526
      %v535 = vsub.f32 %v494, %v527
      %v536 = vsub.f32 %v495, %v528
      %v537 = vsub.f32 %v496, %v529
      %v538 = vsub.f32 %v497, %v530
      %v539 = vsub.f32 %v498, %v531
      %v540 = vsub.f32 %v499, %v532
      %v541 = vmul.f32 %v533, 1.442695
      %v542 = vpow.pop %v541
      %v543 = vmul.f32 %v534, 1.442695
      %v544 = vpow.pop %v543
      %v545 = vmul.f32 %v535, 1.442695
      %v546 = vpow.pop %v545
      %v547 = vmul.f32 %v536, 1.442695
      %v548 = vpow.pop %v547
      %v549 = vmul.f32 %v537, 1.442695
      %v550 = vpow.pop %v549
      %v551 = vmul.f32 %v538, 1.442695
      %v552 = vpow.pop %v551
      %v553 = vmul.f32 %v539, 1.442695
      %v554 = vpow.pop %v553
      %v555 = vmul.f32 %v540, 1.442695
      %v556 = vpow.pop %v555
      %558 = vset.pattern.permute.xlu0 0
      %559 = vperm.xlu0 %558, %v525
      %v560 = vpop.permute.xlu0 %559
      %563 = vset.pattern.permute.xlu0 0
      %564 = vperm.xlu0 %563, %v526
      %v565 = vpop.permute.xlu0 %564
      %568 = vset.pattern.permute.xlu0 0
      %569 = vperm.xlu0 %568, %v527
      %v570 = vpop.permute.xlu0 %569
      %573 = vset.pattern.permute.xlu0 0
      %574 = vperm.xlu0 %573, %v528
      %v575 = vpop.permute.xlu0 %574
      %578 = vset.pattern.permute.xlu0 0
      %579 = vperm.xlu0 %578, %v529
      %v580 = vpop.permute.xlu0 %579
      %583 = vset.pattern.permute.xlu0 0
      %584 = vperm.xlu0 %583, %v530
      %v585 = vpop.permute.xlu0 %584
      %588 = vset.pattern.permute.xlu0 0
      %589 = vperm.xlu0 %588, %v531
      %v590 = vpop.permute.xlu0 %589
      %593 = vset.pattern.permute.xlu0 0
      %594 = vperm.xlu0 %593, %v532
      %v595 = vpop.permute.xlu0 %594
      %v597 = vsub.f32 %v382, %v560
      %v598 = vsub.f32 %v385, %v565
      %v599 = vsub.f32 %v417, %v570
      %v600 = vsub.f32 %v420, %v575
      %v601 = vsub.f32 %v452, %v580
      %v602 = vsub.f32 %v455, %v585
      %v603 = vsub.f32 %v487, %v590
      %v604 = vsub.f32 %v490, %v595
      %v605 = vmul.f32 %v597, 1.442695
      %v606 = vpow.pop %v605
      %v607 = vmul.f32 %v598, 1.442695
      %v608 = vpow.pop %v607
      %v609 = vmul.f32 %v599, 1.442695
      %v610 = vpow.pop %v609
      %v611 = vmul.f32 %v600, 1.442695
      %v612 = vpow.pop %v611
      %v613 = vmul.f32 %v601, 1.442695
      %v614 = vpow.pop %v613
      %v615 = vmul.f32 %v602, 1.442695
      %v616 = vpow.pop %v615
      %v617 = vmul.f32 %v603, 1.442695
      %v618 = vpow.pop %v617
      %v619 = vmul.f32 %v604, 1.442695
      %v620 = vpow.pop %v619
      %v621 = vld [vmem:[#allocation3] sm:$0xff]
      %v622 = vld [vmem:[#allocation3 + $0x8] sm:$0xff]
      %v623 = vld [vmem:[#allocation3 + $0x10] sm:$0xff]
      %v624 = vld [vmem:[#allocation3 + $0x18] sm:$0xff]
      %v625 = vld [vmem:[#allocation3 + $0x20] sm:$0xff]
      %v626 = vld [vmem:[#allocation3 + $0x28] sm:$0xff]
      %v627 = vld [vmem:[#allocation3 + $0x30] sm:$0xff]
      %v628 = vld [vmem:[#allocation3 + $0x38] sm:$0xff]
      %v629 = vmul.f32 %v542, %v621
      %v630 = vmul.f32 %v544, %v622
      %v631 = vmul.f32 %v546, %v623
      %v632 = vmul.f32 %v548, %v624
      %v633 = vmul.f32 %v550, %v625
      %v634 = vmul.f32 %v552, %v626
      %v635 = vmul.f32 %v554, %v627
      %v636 = vmul.f32 %v556, %v628
      %v637 = vsel %vm500, %v606, 0.0
      %638 = vadd.xlane.f32.xlu0 %v637
      %v639 = vpop.xlane.xlu0 %638
      %v640 = vsel %vm500, %v608, 0.0
      %641 = vadd.xlane.f32.xlu0 %v640
      %v642 = vpop.xlane.xlu0 %641
      %v643 = vsel %vm500, %v610, 0.0
      %644 = vadd.xlane.f32.xlu0 %v643
      %v645 = vpop.xlane.xlu0 %644
      %v646 = vsel %vm500, %v612, 0.0
      %647 = vadd.xlane.f32.xlu0 %v646
      %v648 = vpop.xlane.xlu0 %647
      %v649 = vsel %vm500, %v614, 0.0
      %650 = vadd.xlane.f32.xlu0 %v649
      %v651 = vpop.xlane.xlu0 %650
      %v652 = vsel %vm500, %v616, 0.0
      %653 = vadd.xlane.f32.xlu0 %v652
      %v654 = vpop.xlane.xlu0 %653
      %v655 = vsel %vm500, %v618, 0.0
      %656 = vadd.xlane.f32.xlu0 %v655
      %v657 = vpop.xlane.xlu0 %656
      %v658 = vsel %vm500, %v620, 0.0
      %659 = vadd.xlane.f32.xlu0 %v658
      %v660 = vpop.xlane.xlu0 %659
      %v661 = vadd.f32 %v629, %v639
      %v662 = vadd.f32 %v630, %v642
      %v663 = vadd.f32 %v631, %v645
      %v664 = vadd.f32 %v632, %v648
      %v665 = vadd.f32 %v633, %v651
      %v666 = vadd.f32 %v634, %v654
      %v667 = vadd.f32 %v635, %v657
      %v668 = vadd.f32 %v636, %v660
      %vm669 = vcmask 7168
      %670 = vst.msk [vmem:[#allocation3] sm:$0xff] %vm669, %v661
      %671 = vst.msk [vmem:[#allocation3 + $0x8] sm:$0xff] %vm669, %v662
      %672 = vst.msk [vmem:[#allocation3 + $0x10] sm:$0xff] %vm669, %v663
      %673 = vst.msk [vmem:[#allocation3 + $0x18] sm:$0xff] %vm669, %v664
      %674 = vst.msk [vmem:[#allocation3 + $0x20] sm:$0xff] %vm669, %v665
      %675 = vst.msk [vmem:[#allocation3 + $0x28] sm:$0xff] %vm669, %v666
      %676 = vst.msk [vmem:[#allocation3 + $0x30] sm:$0xff] %vm669, %v667
      %677 = vst.msk [vmem:[#allocation3 + $0x38] sm:$0xff] %vm669, %v668
      %v678 = vld [vmem:[#allocation4] sm:$0xff]
      %v679 = vld [vmem:[#allocation4 + $0x8] sm:$0xff]
      %v680 = vld [vmem:[#allocation4 + $0x10] sm:$0xff]
      %v681 = vld [vmem:[#allocation4 + $0x18] sm:$0xff]
      %v682 = vld [vmem:[#allocation4 + $0x20] sm:$0xff]
      %v683 = vld [vmem:[#allocation4 + $0x28] sm:$0xff]
      %v684 = vld [vmem:[#allocation4 + $0x30] sm:$0xff]
      %v685 = vld [vmem:[#allocation4 + $0x38] sm:$0xff]
      %687 = vset.pattern.permute.xlu0 0
      %688 = vperm.xlu0 %687, %v542
      %v689 = vpop.permute.xlu0 %688
      %692 = vset.pattern.permute.xlu0 0
      %693 = vperm.xlu0 %692, %v544
      %v694 = vpop.permute.xlu0 %693
      %697 = vset.pattern.permute.xlu0 0
      %698 = vperm.xlu0 %697, %v546
      %v699 = vpop.permute.xlu0 %698
      %702 = vset.pattern.permute.xlu0 0
      %703 = vperm.xlu0 %702, %v548
      %v704 = vpop.permute.xlu0 %703
      %707 = vset.pattern.permute.xlu0 0
      %708 = vperm.xlu0 %707, %v550
      %v709 = vpop.permute.xlu0 %708
      %712 = vset.pattern.permute.xlu0 0
      %713 = vperm.xlu0 %712, %v552
      %v714 = vpop.permute.xlu0 %713
      %717 = vset.pattern.permute.xlu0 0
      %718 = vperm.xlu0 %717, %v554
      %v719 = vpop.permute.xlu0 %718
      %722 = vset.pattern.permute.xlu0 0
      %723 = vperm.xlu0 %722, %v556
      %v724 = vpop.permute.xlu0 %723
      %v726 = vmul.f32 %v689, %v678
      %v727 = vmul.f32 %v694, %v679
      %v728 = vmul.f32 %v699, %v680
      %v729 = vmul.f32 %v704, %v681
      %v730 = vmul.f32 %v709, %v682
      %v731 = vmul.f32 %v714, %v683
      %v732 = vmul.f32 %v719, %v684
      %v733 = vmul.f32 %v724, %v685
      %v735 = vsel %vm500, %v606, 0
      %v738 = vsel %vm500, %v608, 0
      %740 = vmatpush.msra.mxu0 0.0
      %741 = vmatpush.msra.mxu0 0.0
      %742 = vmatpush.msra.mxu0 0.0
      %743 = vmatpush.msra.mxu0 0.0
      %744 = vmatpush.msra.mxu0 0.0
      %745 = vmatpush.msra.mxu0 0.0
      %746 = vmatpush.msra.mxu0 0.0
      %747 = vmatpush.msra.mxu0 0.0
      %748 = vmatpush.msra.mxu0 0.0
      %749 = vmatpush.msra.mxu0 0.0
      %750 = vmatpush.msra.mxu0 0.0
      %751 = vmatpush.msra.mxu0 0.0
      %752 = vmatpush.msra.mxu0 0.0
      %753 = vmatpush.msra.mxu0 0.0
      %754 = vmatpush.msra.mxu0 %v344
      %755 = vmatpush.msra.mxu0 %v343
      %756 = vmatmul.f32.gmra.mxu0 %v735
      %v757 = vpop.f32.mrf.mxu0
      %v758 = vadd.f32 0.0, %v757
      %759 = vmatmul.f32.gmra.mxu0 %v738
      %v760 = vpop.f32.mrf.mxu0
      %v761 = vadd.f32 0.0, %v760
      %762 = vdwg.mxu0
      %v764 = vsel %vm500, %v610, 0
      %v767 = vsel %vm500, %v612, 0
      %769 = vmatpush.msra.mxu0 0.0
      %770 = vmatpush.msra.mxu0 0.0
      %771 = vmatpush.msra.mxu0 0.0
      %772 = vmatpush.msra.mxu0 0.0
      %773 = vmatpush.msra.mxu0 0.0
      %774 = vmatpush.msra.mxu0 0.0
      %775 = vmatpush.msra.mxu0 0.0
      %776 = vmatpush.msra.mxu0 0.0
      %777 = vmatpush.msra.mxu0 0.0
      %778 = vmatpush.msra.mxu0 0.0
      %779 = vmatpush.msra.mxu0 0.0
      %780 = vmatpush.msra.mxu0 0.0
      %781 = vmatpush.msra.mxu0 0.0
      %782 = vmatpush.msra.mxu0 0.0
      %783 = vmatpush.msra.mxu0 %v346
      %784 = vmatpush.msra.mxu0 %v345
      %785 = vmatmul.f32.gmra.mxu0 %v764
      %v786 = vpop.f32.mrf.mxu0
      %v787 = vadd.f32 0.0, %v786
      %788 = vmatmul.f32.gmra.mxu0 %v767
      %v789 = vpop.f32.mrf.mxu0
      %v790 = vadd.f32 0.0, %v789
      %791 = vdwg.mxu0
      %v793 = vsel %vm500, %v614, 0
      %v796 = vsel %vm500, %v616, 0
      %798 = vmatpush.msra.mxu0 0.0
      %799 = vmatpush.msra.mxu0 0.0
      %800 = vmatpush.msra.mxu0 0.0
      %801 = vmatpush.msra.mxu0 0.0
      %802 = vmatpush.msra.mxu0 0.0
      %803 = vmatpush.msra.mxu0 0.0
      %804 = vmatpush.msra.mxu0 0.0
      %805 = vmatpush.msra.mxu0 0.0
      %806 = vmatpush.msra.mxu0 0.0
      %807 = vmatpush.msra.mxu0 0.0
      %808 = vmatpush.msra.mxu0 0.0
      %809 = vmatpush.msra.mxu0 0.0
      %810 = vmatpush.msra.mxu0 0.0
      %811 = vmatpush.msra.mxu0 0.0
      %812 = vmatpush.msra.mxu0 %v348
      %813 = vmatpush.msra.mxu0 %v347
      %814 = vmatmul.f32.gmra.mxu0 %v793
      %v815 = vpop.f32.mrf.mxu0
      %v816 = vadd.f32 0.0, %v815
      %817 = vmatmul.f32.gmra.mxu0 %v796
      %v818 = vpop.f32.mrf.mxu0
      %v819 = vadd.f32 0.0, %v818
      %820 = vdwg.mxu0
      %v822 = vsel %vm500, %v618, 0
      %v825 = vsel %vm500, %v620, 0
      %827 = vmatpush.msra.mxu0 0.0
      %828 = vmatpush.msra.mxu0 0.0
      %829 = vmatpush.msra.mxu0 0.0
      %830 = vmatpush.msra.mxu0 0.0
      %831 = vmatpush.msra.mxu0 0.0
      %832 = vmatpush.msra.mxu0 0.0
      %833 = vmatpush.msra.mxu0 0.0
      %834 = vmatpush.msra.mxu0 0.0
      %835 = vmatpush.msra.mxu0 0.0
      %836 = vmatpush.msra.mxu0 0.0
      %837 = vmatpush.msra.mxu0 0.0
      %838 = vmatpush.msra.mxu0 0.0
      %839 = vmatpush.msra.mxu0 0.0
      %840 = vmatpush.msra.mxu0 0.0
      %841 = vmatpush.msra.mxu0 %v350
      %842 = vmatpush.msra.mxu0 %v349
      %843 = vmatmul.f32.gmra.mxu0 %v822
      %v844 = vpop.f32.mrf.mxu0
      %v845 = vadd.f32 0.0, %v844
      %846 = vmatmul.f32.gmra.mxu0 %v825
      %v847 = vpop.f32.mrf.mxu0
      %v848 = vadd.f32 0.0, %v847
      %849 = vdwg.mxu0
      %v850 = vadd.f32 %v726, %v758
      %v851 = vadd.f32 %v727, %v761
      %v852 = vadd.f32 %v728, %v787
      %v853 = vadd.f32 %v729, %v790
      %v854 = vadd.f32 %v730, %v816
      %v855 = vadd.f32 %v731, %v819
      %v856 = vadd.f32 %v732, %v845
      %v857 = vadd.f32 %v733, %v848
      %858 = vst.msk [vmem:[#allocation4] sm:$0xff] %vm351, %v850
      %859 = vst.msk [vmem:[#allocation4 + $0x8] sm:$0xff] %vm351, %v851
      %860 = vst.msk [vmem:[#allocation4 + $0x10] sm:$0xff] %vm351, %v852
      %861 = vst.msk [vmem:[#allocation4 + $0x18] sm:$0xff] %vm351, %v853
      %862 = vst.msk [vmem:[#allocation4 + $0x20] sm:$0xff] %vm351, %v854
      %863 = vst.msk [vmem:[#allocation4 + $0x28] sm:$0xff] %vm351, %v855
      %864 = vst.msk [vmem:[#allocation4 + $0x30] sm:$0xff] %vm351, %v856
      %865 = vst.msk [vmem:[#allocation4 + $0x38] sm:$0xff] %vm351, %v857
      %866 = vst.msk [vmem:[#allocation2] sm:$0xff] %vm669, %v525
      %867 = vst.msk [vmem:[#allocation2 + $0x8] sm:$0xff] %vm669, %v526
      %868 = vst.msk [vmem:[#allocation2 + $0x10] sm:$0xff] %vm669, %v527
      %869 = vst.msk [vmem:[#allocation2 + $0x18] sm:$0xff] %vm669, %v528
      %870 = vst.msk [vmem:[#allocation2 + $0x20] sm:$0xff] %vm669, %v529
      %871 = vst.msk [vmem:[#allocation2 + $0x28] sm:$0xff] %vm669, %v530
      %872 = vst.msk [vmem:[#allocation2 + $0x30] sm:$0xff] %vm669, %v531
      %873 = vst.msk [vmem:[#allocation2 + $0x38] sm:$0xff] %vm669, %v532
      // Predicated region
      $region37: #{multi_head_attention.4} parent=31 // pred_check
        %p874 = pneg %p289
      $region38: #{multi_head_attention.4} parent=31 // pred_check_branch
        %876 = sbr.rel (%p874) target = $region40
      $region39: #{multi_head_attention.4} parent=31 // pred_region
        %v877 = vld [vmem:[#allocation3] sm:$0xff]
        %v878 = vld [vmem:[#allocation3 + $0x8] sm:$0xff]
        %v879 = vld [vmem:[#allocation3 + $0x10] sm:$0xff]
        %v880 = vld [vmem:[#allocation3 + $0x18] sm:$0xff]
        %v881 = vld [vmem:[#allocation3 + $0x20] sm:$0xff]
        %v882 = vld [vmem:[#allocation3 + $0x28] sm:$0xff]
        %v883 = vld [vmem:[#allocation3 + $0x30] sm:$0xff]
        %v884 = vld [vmem:[#allocation3 + $0x38] sm:$0xff]
        %v885 = vrcp.pop %v877
        %v886 = vrcp.pop %v878
        %v887 = vrcp.pop %v879
        %v888 = vrcp.pop %v880
        %v889 = vrcp.pop %v881
        %v890 = vrcp.pop %v882
        %v891 = vrcp.pop %v883
        %v892 = vrcp.pop %v884
        %v893 = vld [vmem:[#allocation4] sm:$0xff]
        %v894 = vld [vmem:[#allocation4 + $0x8] sm:$0xff]
        %v895 = vld [vmem:[#allocation4 + $0x10] sm:$0xff]
        %v896 = vld [vmem:[#allocation4 + $0x18] sm:$0xff]
        %v897 = vld [vmem:[#allocation4 + $0x20] sm:$0xff]
        %v898 = vld [vmem:[#allocation4 + $0x28] sm:$0xff]
        %v899 = vld [vmem:[#allocation4 + $0x30] sm:$0xff]
        %v900 = vld [vmem:[#allocation4 + $0x38] sm:$0xff]
        %902 = vset.pattern.permute.xlu0 0
        %903 = vperm.xlu0 %902, %v885
        %v904 = vpop.permute.xlu0 %903
        %907 = vset.pattern.permute.xlu0 0
        %908 = vperm.xlu0 %907, %v886
        %v909 = vpop.permute.xlu0 %908
        %912 = vset.pattern.permute.xlu0 0
        %913 = vperm.xlu0 %912, %v887
        %v914 = vpop.permute.xlu0 %913
        %917 = vset.pattern.permute.xlu0 0
        %918 = vperm.xlu0 %917, %v888
        %v919 = vpop.permute.xlu0 %918
        %922 = vset.pattern.permute.xlu0 0
        %923 = vperm.xlu0 %922, %v889
        %v924 = vpop.permute.xlu0 %923
        %927 = vset.pattern.permute.xlu0 0
        %928 = vperm.xlu0 %927, %v890
        %v929 = vpop.permute.xlu0 %928
        %932 = vset.pattern.permute.xlu0 0
        %933 = vperm.xlu0 %932, %v891
        %v934 = vpop.permute.xlu0 %933
        %937 = vset.pattern.permute.xlu0 0
        %938 = vperm.xlu0 %937, %v892
        %v939 = vpop.permute.xlu0 %938
        %v941 = vmul.f32 %v893, %v904
        %v942 = vmul.f32 %v894, %v909
        %v943 = vmul.f32 %v895, %v914
        %v944 = vmul.f32 %v896, %v919
        %v945 = vmul.f32 %v897, %v924
        %v946 = vmul.f32 %v898, %v929
        %v947 = vmul.f32 %v899, %v934
        %v948 = vmul.f32 %v900, %v939
        %951 = vrot.lane.b32.xlu0 %v943, 32
        %v952 = vpop.permute.xlu0 %951
        %953 = vrot.lane.b32.xlu0 %v944, 32
        %v954 = vpop.permute.xlu0 %953
        %959 = vrot.lane.b32.xlu0 %v945, 64
        %v960 = vpop.permute.xlu0 %959
        %961 = vrot.lane.b32.xlu0 %v946, 64
        %v962 = vpop.permute.xlu0 %961
        %967 = vrot.lane.b32.xlu0 %v947, 96
        %v968 = vpop.permute.xlu0 %967
        %969 = vrot.lane.b32.xlu0 %v948, 96
        %v970 = vpop.permute.xlu0 %969
        %v973 = vsel %vm351, %v941, %v952
        %v974 = vsel %vm351, %v942, %v954
        %vm975 = vcmask 523264
        %v976 = vsel %vm975, %v973, %v960
        %v977 = vsel %vm975, %v974, %v962
        %vm978 = vcmask 785408
        %v979 = vsel %vm978, %v976, %v968
        %v980 = vsel %vm978, %v977, %v970
        %981 = vst [vmem:[%s287] sm:$0xff] %v979
        %982 = vst [vmem:[%s287 + $0x8] sm:$0xff] %v980
      $region40: #{multi_head_attention.4} parent=31 // pred_fallthru
        _
      %s983 = smul.u32 2, %s20
      %p984 = scmp.lt.s32.totalorder %s19, 1
      %s985 = scalar_select %p984, %s19, 1
      %p986 = scmp.lt.s32.totalorder %s983, 1
      %s987 = scalar_select %p986, %s983, 1
      %s988 = smul.addr %s985, 2
      %s989 = sadd.s32 %s987, %s988
      %s990 = smul.addr %s989, 8
      %s991 = scalar_lea.vmem %s3, %s990
      // Predicated region
      $region41: #{multi_head_attention.4} parent=31 // pred_check
        %p992 = pneg %p137
      $region42: #{multi_head_attention.4} parent=31 // pred_check_branch
        %994 = sbr.rel (%p992) target = $region44
      $region43: #{multi_head_attention.4} parent=31 // pred_region
        %s995 = smul.u32 2, %s20
      $region44: #{multi_head_attention.4} parent=31 // pred_fallthru
        _
    $region32: #{multi_head_attention.4} parent=5 // pred_fallthru
      _
    %p996 = scmp.le.s32.totalorder 2, %s9
    // Predicated region
    $region45: #{multi_head_attention.4} parent=5 // pred_check
      %p997 = pneg %p996
    $region46: #{multi_head_attention.4} parent=5 // pred_check_branch
      %999 = sbr.rel (%p997) target = $region48
    $region47: #{multi_head_attention.4} parent=5 // pred_region
      %s1000 = ssub.s32 %s9, 2
      // Predicated region
      $region49: #{multi_head_attention.4} parent=47 // pred_check
        %p1001 = pneg %p143
      $region50: #{multi_head_attention.4} parent=47 // pred_check_branch
        %1003 = sbr.rel (%p1001) target = $region52
      $region51: #{multi_head_attention.4} parent=47 // pred_region
        %s1004 = smul.u32 2, %s23
        %p1005 = scmp.lt.s32.totalorder %s22, 1
        %s1006 = scalar_select %p1005, %s22, 1
        %p1007 = scmp.lt.s32.totalorder %s1004, 1
        %s1008 = scalar_select %p1007, %s1004, 1
        %s1009 = smul.addr %s1006, 2
        %s1010 = sadd.s32 %s1008, %s1009
        %s1011 = smul.addr %s1010, 8
        %s1012 = scalar_lea.vmem %s3, %s1011
      $region52: #{multi_head_attention.4} parent=47 // pred_fallthru
        _
    $region48: #{multi_head_attention.4} parent=5 // pred_fallthru
      _
  $region6: #{multi_head_attention.4} parent=0 // loop_footer
    %s13 = sadd.s32 1, %s9
  $region7: #{multi_head_attention.4} parent=0 // loop_footer_branch
    %8 = sbr.rel target = $region3
  $region8: #{multi_head_attention.4} parent=0 // loop_exit
    _

</llo_original>
